<compile_context>
chip_gen: v7x
topology: tpu7x:2x2x1
jax: 0.10.0
libtpu: 0.0.40
codegen_flags: <defaults>
</compile_context>

<pallas_src>
import functools

import jax
import jax.numpy as jnp
from jax.experimental import pallas as pl
from jax.experimental.pallas import tpu as pltpu


def _round_up(x, m):
    return ((x + m - 1) // m) * m


# ----------------------------------------------------------------------------
# Kernel 1: pre-project the (small) coarse feature table once.
#   proj_table = point_feat @ W_proj + (b_proj + b_skip)
# ----------------------------------------------------------------------------
def _preproject_kernel(point_ref, wp_ref, bcat_ref, tbl_ref):
    tbl_ref[...] = (
        jnp.dot(point_ref[...], wp_ref[...],
                preferred_element_type=jnp.float32)          # DEFAULT precision
        + bcat_ref[...]
    ).astype(tbl_ref.dtype)


# ----------------------------------------------------------------------------
# Kernel 2 (hot loop): fused  proj_table[inverse]  +  parent @ W_skip
# ----------------------------------------------------------------------------
def _unpool_kernel(inv_ref, parent_ref, tbl_ref, ws_ref, out_ref):
    inv = inv_ref[...]                         # (1, TN) int32, lane-dense
    m = tbl_ref.shape[0]
    tn = inv.shape[1]

    # One-hot gather matrix: onehot[c, i] = (c == inverse[i]).  Built from a
    # broadcasted iota (no data-dependent indexing, so garbage indices in the
    # ragged last tile are harmless).
    rows = jax.lax.broadcasted_iota(jnp.int32, (m, tn), 0)   # (M, TN)
    onehot = (rows == inv).astype(tbl_ref.dtype)             # (M, TN), 0/1

    # gathered[i, :] = proj_table[inverse[i], :]  ==  onehot^T @ proj_table.
    # HIGHEST keeps the gathered f32 rows bit-exact (0/1 weights); Mosaic only
    # supports DEFAULT/HIGHEST and DEFAULT would bf16-round the features.
    gathered = jax.lax.dot_general(
        onehot, tbl_ref[...],
        dimension_numbers=(((0,), (0,)), ((), ())),
        preferred_element_type=jnp.float32,
        precision=jax.lax.Precision.HIGHEST)                 # (TN, Cout)

    # Skip path: ordinary linear layer -> DEFAULT (1-pass bf16) precision.
    skip = jnp.dot(parent_ref[...], ws_ref[...],
                   preferred_element_type=jnp.float32)       # (TN, Cout)

    out_ref[...] = (skip + gathered).astype(out_ref.dtype)


@functools.partial(jax.jit, static_argnames=("tile_n",))
def serialized_unpooling_forward(parent_feat, point_feat, inverse,
                                 w_proj, b_proj, w_skip, b_skip, *, tile_n=512):
    """parent_feat: [N, C_skip], point_feat: [M, C_in], inverse: [N] int32 in [0, M),
    w_proj: [C_in, C_out], b_proj: [C_out], w_skip: [C_skip, C_out], b_skip: [C_out].
    Returns [N, C_out] = parent @ w_skip + b_skip + (point @ w_proj + b_proj)[inverse]."""
    n, cs = parent_feat.shape
    m, cin = point_feat.shape
    co = w_proj.shape[1]

    # ---- 1) pre-project the coarse table once (M rows), biases folded in ----
    mpad = _round_up(m, 8)                       # sublane-align (tiny pad)
    point_p = point_feat if mpad == m else (
        jnp.zeros((mpad, cin), point_feat.dtype).at[:m].set(point_feat))
    b_cat = (b_proj + b_skip).reshape(1, co).astype(jnp.float32)

    proj_table = pl.pallas_call(
        _preproject_kernel,
        out_shape=jax.ShapeDtypeStruct((mpad, co), jnp.float32),
    )(point_p, w_proj, b_cat)

    # ---- 2) tile size: big tiles amortize the ~0.35us/step pipeline cost; ----
    #         clamp so there are >= 2 grid steps (v7x megacore) when N allows.
    half = _round_up(pl.cdiv(n, 2), 128)
    tile = max(128, min(tile_n, half))
    grid_n = pl.cdiv(n, tile)                    # ragged last tile handled by Pallas

    inv_row = inverse.astype(jnp.int32).reshape(1, n)   # lane-dense index row

    out = pl.pallas_call(
        _unpool_kernel,
        out_shape=jax.ShapeDtypeStruct((n, co), parent_feat.dtype),
        grid_spec=pltpu.PrefetchScalarGridSpec(
            num_scalar_prefetch=0,
            grid=(grid_n,),
            in_specs=[
                pl.BlockSpec((1, tile), lambda i: (0, i)),      # inverse (lane-dense)
                pl.BlockSpec((tile, cs), lambda i: (i, 0)),     # parent feat tile
                pl.BlockSpec((mpad, co), lambda i: (0, 0)),     # projected table (resident)
                pl.BlockSpec((cs, co), lambda i: (0, 0)),       # W_skip (resident)
            ],
            out_specs=pl.BlockSpec((tile, co), lambda i: (i, 0)),
        ),
        compiler_params=pltpu.CompilerParams(
            dimension_semantics=("parallel",)),
    )(inv_row, parent_feat, proj_table, w_skip)
    return out


# ----------------------------------------------------------------------------
# Pure-JAX reference (mirrors the PyTorch forward with norm/act = None).
# Computed at HIGHEST precision as "ground truth"; the kernel's linear layers
# run at TPU-default (bf16-pass) precision, hence the ~5e-3 tolerance below.
# ----------------------------------------------------------------------------
def reference(parent_feat, point_feat, inverse, w_proj, b_proj, w_skip, b_skip):
    proj = jnp.dot(point_feat, w_proj,
                   precision=jax.lax.Precision.HIGHEST) + b_proj
    skip = jnp.dot(parent_feat, w_skip,
                   precision=jax.lax.Precision.HIGHEST) + b_skip
    return skip + proj[inverse]


# ----------------------------------------------------------------------------
# Demo
# ----------------------------------------------------------------------------
if __name__ == "__main__":
    key = jax.random.PRNGKey(0)
    k_pf, k_cf, k_inv, k_wp, k_bp, k_ws, k_bs = jax.random.split(key, 7)

    # Small shapes consistent with a PTv3 decoder unpooling stage:
    N = 300                 # fine (parent) points — not a multiple of the tile
    M = 40                  # coarse (pooled) points
    in_channels = 64        # coarse feature width
    skip_channels = 32      # parent (skip) feature width
    out_channels = 128      # output width (lane-dense)

    parent_feat = jax.random.normal(k_pf, (N, skip_channels), dtype=jnp.float32)
    point_feat = jax.random.normal(k_cf, (M, in_channels), dtype=jnp.float32)
    inverse = jax.random.randint(k_inv, (N,), 0, M, dtype=jnp.int32)

    # nn.Linear parameters (stored [in, out]; bias present by default)
    w_proj = jax.random.normal(k_wp, (in_channels, out_channels), jnp.float32) * 0.05
    b_proj = jax.random.normal(k_bp, (out_channels,), jnp.float32) * 0.05
    w_skip = jax.random.normal(k_ws, (skip_channels, out_channels), jnp.float32) * 0.05
    b_skip = jax.random.normal(k_bs, (out_channels,), jnp.float32) * 0.05

    out = serialized_unpooling_forward(parent_feat, point_feat, inverse,
                                       w_proj, b_proj, w_skip, b_skip)
    out = jax.block_until_ready(out)

    ref = reference(parent_feat, point_feat, inverse,
                    w_proj, b_proj, w_skip, b_skip)

    assert out.shape == (N, out_channels)
    # Tolerance covers the bf16-pass (DEFAULT precision) linear layers; real
    # bugs (wrong gather / wrong tile) produce O(0.5) errors.
    assert jnp.allclose(out, ref, atol=5e-3, rtol=5e-3), "kernel/reference mismatch"
    print("KERNEL_OK")
</pallas_src>

<mosaic_0001>
module attributes {stable_mosaic.version = 11 : i64} {
  func.func @_preproject_kernel(%arg0: memref<40x64xf32, #tpu.memory_space<vmem>>, %arg1: memref<64x128xf32, #tpu.memory_space<vmem>>, %arg2: memref<1x128xf32, #tpu.memory_space<vmem>>, %arg3: memref<40x128xf32, #tpu.memory_space<vmem>>) attributes {dimension_semantics = [], scalar_prefetch = 0 : i64, scratch_operands = 0 : i64, tpu.core_type = #tpu.core_type<tc>} {
    %c0 = arith.constant 0 : index
    %c0_0 = arith.constant 0 : index
    %0 = vector.load %arg0[%c0, %c0_0] : memref<40x64xf32, #tpu.memory_space<vmem>>, vector<40x64xf32>
    %c0_1 = arith.constant 0 : index
    %c0_2 = arith.constant 0 : index
    %1 = vector.load %arg1[%c0_1, %c0_2] : memref<64x128xf32, #tpu.memory_space<vmem>>, vector<64x128xf32>
    %cst = arith.constant dense<0.000000e+00> : vector<40x128xf32>
    %2 = tpu.matmul %0, %1, %cst {dimension_numbers = #tpu.dot_dimension_numbers<[1], [0], [0], [1], [0, 0, 1, 1], [], []>} : vector<40x64xf32>, vector<64x128xf32>, vector<40x128xf32> -> vector<40x128xf32>
    %c0_3 = arith.constant 0 : index
    %c0_4 = arith.constant 0 : index
    %3 = vector.load %arg2[%c0_3, %c0_4] : memref<1x128xf32, #tpu.memory_space<vmem>>, vector<1x128xf32>
    %4 = vector.broadcast %3 : vector<1x128xf32> to vector<40x128xf32>
    %5 = arith.addf %2, %4 : vector<40x128xf32>
    %c0_5 = arith.constant 0 : index
    %c0_6 = arith.constant 0 : index
    %6 = vector.load %arg3[%c0_5, %c0_6] : memref<40x128xf32, #tpu.memory_space<vmem>>, vector<40x128xf32>
    tpu.vector_store %arg3[%c0_5, %c0_6], %5 {strides = array<i32>} : memref<40x128xf32, #tpu.memory_space<vmem>>, vector<40x128xf32>,
    return
  }
}

module attributes {stable_mosaic.version = 11 : i64} {
  func.func @_unpool_kernel(%arg0: i32, %arg1: memref<1x256xi32, #tpu.memory_space<vmem>>, %arg2: memref<256x32xf32, #tpu.memory_space<vmem>>, %arg3: memref<40x128xf32, #tpu.memory_space<vmem>>, %arg4: memref<32x128xf32, #tpu.memory_space<vmem>>, %arg5: memref<256x128xf32, #tpu.memory_space<vmem>>) attributes {dimension_semantics = [#tpu.dimension_semantics<parallel>], iteration_bounds = array<i64: 2>, scalar_prefetch = 0 : i64, scratch_operands = 0 : i64, tpu.core_type = #tpu.core_type<tc>, window_params = [{transform_indices = @transform_0, window_bounds = array<i64: 1, 256>}, {transform_indices = @transform_1, window_bounds = array<i64: 256, 32>}, {pipeline_mode = #tpu.pipeline_mode<synchronous>, transform_indices = @transform_2, window_bounds = array<i64: 40, 128>}, {pipeline_mode = #tpu.pipeline_mode<synchronous>, transform_indices = @transform_3, window_bounds = array<i64: 32, 128>}, {transform_indices = @transform_4, window_bounds = array<i64: 256, 128>}]} {
    %c0 = arith.constant 0 : index
    %c0_0 = arith.constant 0 : index
    %0 = vector.load %arg1[%c0, %c0_0] : memref<1x256xi32, #tpu.memory_space<vmem>>, vector<1x256xi32>
    %1 = tpu.iota {dimensions = array<i32: 0>} : vector<40x256xi32>
    %2 = vector.broadcast %0 : vector<1x256xi32> to vector<40x256xi32>
    %3 = arith.cmpi eq, %1, %2 : vector<40x256xi32>
    %4 = arith.extui %3 : vector<40x256xi1> to vector<40x256xi32>
    %5 = arith.sitofp %4 : vector<40x256xi32> to vector<40x256xf32>
    %c0_1 = arith.constant 0 : index
    %c0_2 = arith.constant 0 : index
    %6 = vector.load %arg3[%c0_1, %c0_2] : memref<40x128xf32, #tpu.memory_space<vmem>>, vector<40x128xf32>
    %cst = arith.constant dense<0.000000e+00> : vector<256x128xf32>
    %7 = tpu.matmul %5, %6, %cst {dimension_numbers = #tpu.dot_dimension_numbers<[0], [0], [1], [1], [0, 1, 1, 1], [], []>, precision = #tpu.contract_precision<fp32>} : vector<40x256xf32>, vector<40x128xf32>, vector<256x128xf32> -> vector<256x128xf32>
    %c0_3 = arith.constant 0 : index
    %c0_4 = arith.constant 0 : index
    %8 = vector.load %arg2[%c0_3, %c0_4] : memref<256x32xf32, #tpu.memory_space<vmem>>, vector<256x32xf32>
    %c0_5 = arith.constant 0 : index
    %c0_6 = arith.constant 0 : index
    %9 = vector.load %arg4[%c0_5, %c0_6] : memref<32x128xf32, #tpu.memory_space<vmem>>, vector<32x128xf32>
    %cst_7 = arith.constant dense<0.000000e+00> : vector<256x128xf32>
    %10 = tpu.matmul %8, %9, %cst_7 {dimension_numbers = #tpu.dot_dimension_numbers<[1], [0], [0], [1], [0, 0, 1, 1], [], []>} : vector<256x32xf32>, vector<32x128xf32>, vector<256x128xf32> -> vector<256x128xf32>
    %11 = arith.addf %10, %7 : vector<256x128xf32>
    %c0_8 = arith.constant 0 : index
    %c0_9 = arith.constant 0 : index
    %12 = vector.load %arg5[%c0_8, %c0_9] : memref<256x128xf32, #tpu.memory_space<vmem>>, vector<256x128xf32>
    tpu.vector_store %arg5[%c0_8, %c0_9], %11 {strides = array<i32>} : memref<256x128xf32, #tpu.memory_space<vmem>>, vector<256x128xf32>,
    return
  }
  func.func @transform_0(%arg0: i32) -> (i32, i32) {
    %c0_i32 = arith.constant 0 : i32
    %c0_i32_0 = arith.constant 0 : i32
    return %c0_i32, %arg0 : i32, i32
  }
  func.func @transform_1(%arg0: i32) -> (i32, i32) {
    %c0_i32 = arith.constant 0 : i32
    %c0_i32_0 = arith.constant 0 : i32
    return %arg0, %c0_i32 : i32, i32
  }
  func.func @transform_2(%arg0: i32) -> (i32, i32) {
    %c0_i32 = arith.constant 0 : i32
    %c0_i32_0 = arith.constant 0 : i32
    %c0_i32_1 = arith.constant 0 : i32
    return %c0_i32, %c0_i32_0 : i32, i32
  }
  func.func @transform_3(%arg0: i32) -> (i32, i32) {
    %c0_i32 = arith.constant 0 : i32
    %c0_i32_0 = arith.constant 0 : i32
    %c0_i32_1 = arith.constant 0 : i32
    return %c0_i32, %c0_i32_0 : i32, i32
  }
  func.func @transform_4(%arg0: i32) -> (i32, i32) {
    %c0_i32 = arith.constant 0 : i32
    %c0_i32_0 = arith.constant 0 : i32
    return %arg0, %c0_i32 : i32, i32
  }
}

</mosaic_0001>

<llo_original>
// kernel: serialized_unpooling_forward.2
$region0: #{serialized_unpooling_forward.2}
  #allocation0 [shape = 'u32[]', space=smem, size = 0x4, offset = 0x4, fixed_abs, tag = 'smem constant byte address 0x4 - core index']
  #allocation1 [shape = 'u32[144,128]{1,0:T(1,128)}', space=vmem, size = 0x12000, scoped, tag = 'internal scratch']
  %s0 = inlined_call_operand.hbm [shape: f32[40,64], index: 0, kind: input, shape index: {}]
  %s1 = inlined_call_operand.hbm [shape: f32[64,128], index: 1, kind: input, shape index: {}]
  %s2 = inlined_call_operand.vmem [shape: f32[1,128], index: 2, kind: input, shape index: {}]
  %s3 = inlined_call_operand.vmem [shape: f32[40,128], index: 3, kind: output, shape index: {}]
  %s4 = sld [smem:[#allocation0]]
  $region30: #{serialized_unpooling_forward.2} parent=0
    _
  %s6 = ssub.s32 1, %s4
  %s7 = scalar_select 0, %s6, %s4
  $region1: #{serialized_unpooling_forward.2} parent=0
    #allocation2 [shape = 'u8[20480]{0}', space=vmem, size = 0x5000, scoped, tag = 'input window, operand 0, single buffered']
    #allocation3 [shape = 's32[1]{0}', space=sflag, size = 0x4, scoped, tag = 'scoped memory for serialized_unpooling_forward.2']
    #allocation4 [shape = 'u8[32768]{0}', space=vmem, size = 0x8000, scoped, tag = 'input window, operand 1, single buffered']
    #allocation5 [shape = 's32[1]{0}', space=sflag, size = 0x4, scoped, tag = 'scoped memory for serialized_unpooling_forward.2']
    %8 = vsyncpa [#allocation3], 0
    %9 = vsyncpa [#allocation5], 0
    // Predicated region
    $region2: #{serialized_unpooling_forward.2} parent=1 // pred_check
      _
    $region3: #{serialized_unpooling_forward.2} parent=1 // pred_check_branch
      %11 = sbr.rel (0) target = $region5
    $region4: #{serialized_unpooling_forward.2} parent=1 // pred_region
      %s13 = ssub.s32 640, 640
      %14 = vsyncadd [#allocation3], %s13
      %s15 = sshll.u32 [#allocation2], 4
      %s16 = int_to_ptr.vmem [resolvable:$true] %s15
      %21 = dma.hbm_to_vmem [thread:$0]  %s0, 640, %s16, [#allocation3], 128, 128, 8
    $region5: #{serialized_unpooling_forward.2} parent=1 // pred_fallthru
      _
    // Predicated region
    $region6: #{serialized_unpooling_forward.2} parent=1 // pred_check
      _
    $region7: #{serialized_unpooling_forward.2} parent=1 // pred_check_branch
      %23 = sbr.rel (0) target = $region9
    $region8: #{serialized_unpooling_forward.2} parent=1 // pred_region
      %s25 = ssub.s32 1024, 1024
      %26 = vsyncadd [#allocation5], %s25
      %s27 = sshll.u32 [#allocation4], 4
      %s28 = int_to_ptr.vmem [resolvable:$true] %s27
      %33 = dma.hbm_to_vmem [thread:$0]  %s1, 1024, %s28, [#allocation5], 128, 128, 8
    $region9: #{serialized_unpooling_forward.2} parent=1 // pred_fallthru
      _
    // Predicated region
    $region10: #{serialized_unpooling_forward.2} parent=1 // pred_check
      _
    $region11: #{serialized_unpooling_forward.2} parent=1 // pred_check_branch
      %35 = sbr.rel (0) target = $region13
    $region12: #{serialized_unpooling_forward.2} parent=1 // pred_region
      _
    $region13: #{serialized_unpooling_forward.2} parent=1 // pred_fallthru
      _
    // Predicated region
    $region14: #{serialized_unpooling_forward.2} parent=1 // pred_check
      _
    $region15: #{serialized_unpooling_forward.2} parent=1 // pred_check_branch
      %37 = sbr.rel (0) target = $region17
    $region16: #{serialized_unpooling_forward.2} parent=1 // pred_region
      %38 = dma.done [#allocation3], 640
    $region17: #{serialized_unpooling_forward.2} parent=1 // pred_fallthru
      _
    // Predicated region
    $region18: #{serialized_unpooling_forward.2} parent=1 // pred_check
      _
    $region19: #{serialized_unpooling_forward.2} parent=1 // pred_check_branch
      %40 = sbr.rel (0) target = $region21
    $region20: #{serialized_unpooling_forward.2} parent=1 // pred_region
      %41 = dma.done [#allocation5], 1024
    $region21: #{serialized_unpooling_forward.2} parent=1 // pred_fallthru
      _
    %v42 = vld [vmem:[#allocation2] sm:$0xff]
    %v43 = vld [vmem:[#allocation2 + $0x8] sm:$0xff]
    %v44 = vld [vmem:[#allocation2 + $0x10] sm:$0xff]
    %v45 = vld [vmem:[#allocation2 + $0x18] sm:$0xff]
    %v46 = vld [vmem:[#allocation2 + $0x20] sm:$0xff]
    %v47 = vld [vmem:[#allocation4] sm:$0xff]
    %v48 = vld [vmem:[#allocation4 + $0x8] sm:$0xff]
    %v49 = vld [vmem:[#allocation4 + $0x10] sm:$0xff]
    %v50 = vld [vmem:[#allocation4 + $0x18] sm:$0xff]
    %v51 = vld [vmem:[#allocation4 + $0x20] sm:$0xff]
    %v52 = vld [vmem:[#allocation4 + $0x28] sm:$0xff]
    %v53 = vld [vmem:[#allocation4 + $0x30] sm:$0xff]
    %v54 = vld [vmem:[#allocation4 + $0x38] sm:$0xff]
    %v55 = vld [vmem:[%s2] sm:$0x1]
    %v57 = vlaneseq
    %v58 = vshrl.u32 %v57, 7
    %v59 = vsub.s32 0, %v58
    %v60 = vrot.slane %v55, %v59
    %vm62 = vcmask 523264
    %v64 = vsel %vm62, %v42, 0
    %v67 = vsel %vm62, %v43, 0
    %v70 = vsel %vm62, %v44, 0
    %v73 = vsel %vm62, %v45, 0
    %v76 = vsel %vm62, %v46, 0
    %78 = vmatprep.subr.mxu0 0.0
    %79 = vmatpush1.msra.mxu0 %v47
    %80 = vmatprep.subr.mxu0 0.0
    %81 = vmatpush1.msra.mxu0 %v48
    %82 = vmatprep.subr.mxu0 0.0
    %83 = vmatpush1.msra.mxu0 %v49
    %84 = vmatprep.subr.mxu0 0.0
    %85 = vmatpush1.msra.mxu0 %v50
    %86 = vmatprep.subr.mxu0 0.0
    %87 = vmatpush1.msra.mxu0 %v51
    %88 = vmatprep.subr.mxu0 0.0
    %89 = vmatpush1.msra.mxu0 %v52
    %90 = vmatprep.subr.mxu0 0.0
    %91 = vmatpush1.msra.mxu0 %v53
    %92 = vmatprep.subr.mxu0 0.0
    %93 = vmatpush1.msra.mxu0 %v54
    %94 = vmatprep.subr.mxu0 0.0
    %95 = vmatpush1.msra.mxu0 0.0
    %96 = vmatprep.subr.mxu0 0.0
    %97 = vmatpush1.msra.mxu0 0.0
    %98 = vmatprep.subr.mxu0 0.0
    %99 = vmatpush1.msra.mxu0 0.0
    %100 = vmatprep.subr.mxu0 0.0
    %101 = vmatpush1.msra.mxu0 0.0
    %102 = vmatprep.subr.mxu0 0.0
    %103 = vmatpush1.msra.mxu0 0.0
    %104 = vmatprep.subr.mxu0 0.0
    %105 = vmatpush1.msra.mxu0 0.0
    %106 = vmatprep.subr.mxu0 0.0
    %107 = vmatpush1.msra.mxu0 0.0
    %108 = vmatprep.subr.mxu0 0.0
    %109 = vmatpush1.msra.mxu0 0.0
    %110 = vmatprep.subr.mxu0 0.0
    %111 = vmatpush1.msra.mxu0 0.0
    %112 = vmatprep.subr.mxu0 0.0
    %113 = vmatpush1.msra.mxu0 0.0
    %114 = vmatprep.subr.mxu0 0.0
    %115 = vmatpush1.msra.mxu0 0.0
    %116 = vmatprep.subr.mxu0 0.0
    %117 = vmatpush1.msra.mxu0 0.0
    %118 = vmatprep.subr.mxu0 0.0
    %119 = vmatpush1.msra.mxu0 0.0
    %120 = vmatprep.subr.mxu0 0.0
    %121 = vmatpush1.msra.mxu0 0.0
    %122 = vmatprep.subr.mxu0 0.0
    %123 = vmatpush1.msra.mxu0 0.0
    %124 = vmatprep.subr.mxu0 0.0
    %125 = vmatpush1.msra.mxu0 0.0
    %126 = vmatprep.subr.mxu0 0.0
    %127 = vmatpush1.msra.mxu0 0.0
    %128 = vmatprep.subr.mxu0 0.0
    %129 = vmatpush1.msra.mxu0 0.0
    %130 = vmatprep.subr.mxu0 0.0
    %131 = vmatpush1.msra.mxu0 0.0
    %132 = vmatprep.subr.mxu0 0.0
    %133 = vmatpush1.msra.mxu0 0.0
    %134 = vmatprep.subr.mxu0 0.0
    %135 = vmatpush1.msra.mxu0 0.0
    %136 = vmatprep.subr.mxu0 0.0
    %137 = vmatpush1.msra.mxu0 0.0
    %138 = vmatprep.subr.mxu0 0.0
    %139 = vmatpush1.msra.mxu0 0.0
    %140 = vmatprep.subr.mxu0 0.0
    %141 = vmatpush1.msra.mxu0 0.0
    %142 = vmatprep.mubr.f32.mxu0 0.0
    %143 = vmatmul.mubr.f32.gmra.mrb[0].mxu0 %v64
    %v144 = vpop.f32.mrb[0].mxu0
    %v145 = vadd.f32 %v60, %v144
    %v146 = vpop.f32.mrb[0].mxu0
    %147 = vmatprep.mubr.f32.mxu0 0.0
    %148 = vmatmul.mubr.f32.gmra.mrb[0].mxu0 %v67
    %v149 = vpop.f32.mrb[0].mxu0
    %v150 = vadd.f32 %v60, %v149
    %v151 = vpop.f32.mrb[0].mxu0
    %152 = vmatprep.mubr.f32.mxu0 0.0
    %153 = vmatmul.mubr.f32.gmra.mrb[0].mxu0 %v70
    %v154 = vpop.f32.mrb[0].mxu0
    %v155 = vadd.f32 %v60, %v154
    %v156 = vpop.f32.mrb[0].mxu0
    %157 = vmatprep.mubr.f32.mxu0 0.0
    %158 = vmatmul.mubr.f32.gmra.mrb[0].mxu0 %v73
    %v159 = vpop.f32.mrb[0].mxu0
    %v160 = vadd.f32 %v60, %v159
    %v161 = vpop.f32.mrb[0].mxu0
    %162 = vmatprep.mubr.f32.mxu0 0.0
    %163 = vmatmul.mubr.f32.gmra.mrb[0].mxu0 %v76
    %v164 = vpop.f32.mrb[0].mxu0
    %v165 = vadd.f32 %v60, %v164
    %v166 = vpop.f32.mrb[0].mxu0
    %167 = vdwg.mxu0
    %168 = vst [vmem:[%s3] sm:$0xff] %v145
    %169 = vst [vmem:[%s3 + $0x8] sm:$0xff] %v150
    %170 = vst [vmem:[%s3 + $0x10] sm:$0xff] %v155
    %171 = vst [vmem:[%s3 + $0x18] sm:$0xff] %v160
    %172 = vst [vmem:[%s3 + $0x20] sm:$0xff] %v165
    // Predicated region
    $region22: #{serialized_unpooling_forward.2} parent=1 // pred_check
      _
    $region23: #{serialized_unpooling_forward.2} parent=1 // pred_check_branch
      %174 = sbr.rel (0) target = $region25
    $region24: #{serialized_unpooling_forward.2} parent=1 // pred_region
      _
    $region25: #{serialized_unpooling_forward.2} parent=1 // pred_fallthru
      _
    // Predicated region
    $region26: #{serialized_unpooling_forward.2} parent=1 // pred_check
      _
    $region27: #{serialized_unpooling_forward.2} parent=1 // pred_check_branch
      %176 = sbr.rel (0) target = $region29
    $region28: #{serialized_unpooling_forward.2} parent=1 // pred_region
      _
    $region29: #{serialized_unpooling_forward.2} parent=1 // pred_fallthru
      _
    %177 = vsyncpa [#allocation3], 1
    %178 = vsyncpa [#allocation5], 1

// kernel: serialized_unpooling_forward.3
$region0: #{serialized_unpooling_forward.3}
  #allocation0 [shape = 'u32[]', space=smem, size = 0x4, offset = 0x4, fixed_abs, tag = 'smem constant byte address 0x4 - core index']
  #allocation1 [shape = 'u32[144,128]{1,0:T(1,128)}', space=vmem, size = 0x12000, scoped, tag = 'internal scratch']
  %s0 = inlined_call_operand.vmem [shape: s32[1,300], index: 0, kind: input, shape index: {}]
  %s1 = inlined_call_operand.vmem [shape: f32[300,32], index: 1, kind: input, shape index: {}]
  %s2 = inlined_call_operand.vmem [shape: f32[40,128], index: 2, kind: input, shape index: {}]
  %s3 = inlined_call_operand.vmem [shape: f32[32,128], index: 3, kind: input, shape index: {}]
  %s4 = inlined_call_operand.hbm [shape: f32[300,128], index: 4, kind: output, shape index: {}]
  %s5 = sld [smem:[#allocation0]]
  $region49: #{serialized_unpooling_forward.3} parent=0
    _
  %s7 = ssub.s32 1, %s5
  %s8 = scalar_select 0, %s7, %s5
  $region1: #{serialized_unpooling_forward.3} parent=0
    #allocation2 [shape = 'u8[262144]{0}', space=vmem, size = 0x40000, scoped, tag = 'output window, operand 0']
    #allocation3 [shape = 's32[2]{0}', space=sflag, size = 0x8, scoped, tag = 'scoped memory for serialized_unpooling_forward.3']
    %9 = vsyncpa [#allocation3], 0
    %s10 = scalar_lea.sflag [#allocation3], 1
    %11 = vsyncpa %s10, 0
    loop: start=0, step=1, limit=4
    $region2: #{serialized_unpooling_forward.3} parent=1 // loop_pre_header
      _
    $region3: #{serialized_unpooling_forward.3} parent=1 // loop_header
      %s13 = sphi 0, %s17
      %p14 = scmp.ge.s32.totalorder %s13, 4
      %s23 = sphi 0, %s25
      %s26 = sphi 0, %s23
      %s27 = sphi 0, %s26
      %s43 = sphi 0, %s27
      %s49 = sphi 0, %s51
      %s52 = sphi 0, %s49
      %s53 = sphi 0, %s52
      %s69 = sphi 0, %s53
      %s73 = sphi 0, %s73
      %s75 = sphi 0, %s73
      %s76 = sphi 0, %s75
      %s90 = sphi 0, %s76
      %s94 = sphi 0, %s94
      %s96 = sphi 0, %s94
      %s97 = sphi 0, %s96
      %s111 = sphi 0, %s97
      %s117 = sphi 0, %s119
      %s120 = sphi 0, %s117
      %s121 = sphi 0, %s120
      %s137 = sphi 0, %s121
    $region4: #{serialized_unpooling_forward.3} parent=1 // loop_header_branch
      %16 = sbr.rel (%p14) target = $region8
    $region5: #{serialized_unpooling_forward.3} parent=1 // loop_body
      %s18 = ssub.s32 %s13, 1
      %s19 = ssub.s32 %s13, 2
      %s20 = sadd.s32 %s13, 1
      %s21 = ssub.s32 %s13, %s20
      %p22 = scmp.eq.s32.totalorder %s21, 0
      %s24 = sadd.s32 %s23, 1
      %s25 = scalar_select %p22, %s23, %s24
      %p28 = pneg %p22
      %p29 = scmp.eq.s32.totalorder %s13, 1
      %p30 = por %p28, %p29
      %p31 = scmp.ne.s32.totalorder %s23, %s26
      %p32 = scmp.eq.s32.totalorder %s13, 0
      %p33 = por %p31, %p32
      %p34 = scmp.ne.s32.totalorder %s23, %s26
      %p35 = scmp.eq.s32.totalorder %s18, 1
      %p36 = por %p34, %p35
      %p37 = scmp.ne.s32.totalorder %s26, %s27
      %p38 = scmp.eq.s32.totalorder %s18, 0
      %p39 = por %p37, %p38
      %p40 = scmp.ne.s32.totalorder %s26, %s27
      %p41 = scmp.eq.s32.totalorder %s19, 1
      %p42 = por %p40, %p41
      %p44 = scmp.ne.s32.totalorder %s27, %s43
      %p45 = scmp.eq.s32.totalorder %s19, 0
      %p46 = por %p44, %p45
      %s47 = ssub.s32 %s13, %s20
      %p48 = scmp.eq.s32.totalorder %s47, 0
      %s50 = sadd.s32 %s49, 1
      %s51 = scalar_select %p48, %s49, %s50
      %p54 = pneg %p48
      %p55 = scmp.eq.s32.totalorder %s13, 1
      %p56 = por %p54, %p55
      %p57 = scmp.ne.s32.totalorder %s49, %s52
      %p58 = scmp.eq.s32.totalorder %s13, 0
      %p59 = por %p57, %p58
      %p60 = scmp.ne.s32.totalorder %s49, %s52
      %p61 = scmp.eq.s32.totalorder %s18, 1
      %p62 = por %p60, %p61
      %p63 = scmp.ne.s32.totalorder %s52, %s53
      %p64 = scmp.eq.s32.totalorder %s18, 0
      %p65 = por %p63, %p64
      %p66 = scmp.ne.s32.totalorder %s52, %s53
      %p67 = scmp.eq.s32.totalorder %s19, 1
      %p68 = por %p66, %p67
      %p70 = scmp.ne.s32.totalorder %s53, %s69
      %p71 = scmp.eq.s32.totalorder %s19, 0
      %p72 = por %p70, %p71
      %s74 = sadd.s32 %s73, 1
      %p77 = scmp.eq.s32.totalorder %s13, 1
      %p78 = scmp.ne.s32.totalorder %s73, %s75
      %p79 = scmp.eq.s32.totalorder %s13, 0
      %p80 = por %p78, %p79
      %p81 = scmp.ne.s32.totalorder %s73, %s75
      %p82 = scmp.eq.s32.totalorder %s18, 1
      %p83 = por %p81, %p82
      %p84 = scmp.ne.s32.totalorder %s75, %s76
      %p85 = scmp.eq.s32.totalorder %s18, 0
      %p86 = por %p84, %p85
      %p87 = scmp.ne.s32.totalorder %s75, %s76
      %p88 = scmp.eq.s32.totalorder %s19, 1
      %p89 = por %p87, %p88
      %p91 = scmp.ne.s32.totalorder %s76, %s90
      %p92 = scmp.eq.s32.totalorder %s19, 0
      %p93 = por %p91, %p92
      %s95 = sadd.s32 %s94, 1
      %p98 = scmp.eq.s32.totalorder %s13, 1
      %p99 = scmp.ne.s32.totalorder %s94, %s96
      %p100 = scmp.eq.s32.totalorder %s13, 0
      %p101 = por %p99, %p100
      %p102 = scmp.ne.s32.totalorder %s94, %s96
      %p103 = scmp.eq.s32.totalorder %s18, 1
      %p104 = por %p102, %p103
      %p105 = scmp.ne.s32.totalorder %s96, %s97
      %p106 = scmp.eq.s32.totalorder %s18, 0
      %p107 = por %p105, %p106
      %p108 = scmp.ne.s32.totalorder %s96, %s97
      %p109 = scmp.eq.s32.totalorder %s19, 1
      %p110 = por %p108, %p109
      %p112 = scmp.ne.s32.totalorder %s97, %s111
      %p113 = scmp.eq.s32.totalorder %s19, 0
      %p114 = por %p112, %p113
      %s115 = ssub.s32 %s13, %s20
      %p116 = scmp.eq.s32.totalorder %s115, 0
      %s118 = sadd.s32 %s117, 1
      %s119 = scalar_select %p116, %s117, %s118
      %p122 = pneg %p116
      %p123 = scmp.eq.s32.totalorder %s13, 1
      %p124 = por %p122, %p123
      %p125 = scmp.ne.s32.totalorder %s117, %s120
      %p126 = scmp.eq.s32.totalorder %s13, 0
      %p127 = por %p125, %p126
      %p128 = scmp.ne.s32.totalorder %s117, %s120
      %p129 = scmp.eq.s32.totalorder %s18, 1
      %p130 = por %p128, %p129
      %p131 = scmp.ne.s32.totalorder %s120, %s121
      %p132 = scmp.eq.s32.totalorder %s18, 0
      %p133 = por %p131, %p132
      %p134 = scmp.ne.s32.totalorder %s120, %s121
      %p135 = scmp.eq.s32.totalorder %s19, 1
      %p136 = por %p134, %p135
      %p138 = scmp.ne.s32.totalorder %s121, %s137
      %p139 = scmp.eq.s32.totalorder %s19, 0
      %p140 = por %p138, %p139
      %p141 = scmp.le.s32.totalorder 1, %s13
      %p142 = scmp.lt.s32.totalorder %s13, 3
      %p143 = pnand %p141, %p142
      %p144 = pneg %p143
      // Predicated region
      $region9: #{serialized_unpooling_forward.3} parent=5 // pred_check
        _
      $region10: #{serialized_unpooling_forward.3} parent=5 // pred_check_branch
        %146 = sbr.rel (%p143) target = $region12
      $region11: #{serialized_unpooling_forward.3} parent=5 // pred_region
        %s147 = ssub.s32 %s13, 1
        // Predicated region
        $region13: #{serialized_unpooling_forward.3} parent=11 // pred_check
          %p148 = pneg %p86
        $region14: #{serialized_unpooling_forward.3} parent=11 // pred_check_branch
          %150 = sbr.rel (%p148) target = $region16
        $region15: #{serialized_unpooling_forward.3} parent=11 // pred_region
          _
        $region16: #{serialized_unpooling_forward.3} parent=11 // pred_fallthru
          _
        // Predicated region
        $region17: #{serialized_unpooling_forward.3} parent=11 // pred_check
          %p151 = pneg %p107
        $region18: #{serialized_unpooling_forward.3} parent=11 // pred_check_branch
          %153 = sbr.rel (%p151) target = $region20
        $region19: #{serialized_unpooling_forward.3} parent=11 // pred_region
          _
        $region20: #{serialized_unpooling_forward.3} parent=11 // pred_fallthru
          _
      $region12: #{serialized_unpooling_forward.3} parent=5 // pred_fallthru
        _
      %p154 = scmp.lt.s32.totalorder %s13, 2
      // Predicated region
      $region21: #{serialized_unpooling_forward.3} parent=5 // pred_check
        %p155 = pneg %p154
      $region22: #{serialized_unpooling_forward.3} parent=5 // pred_check_branch
        %157 = sbr.rel (%p155) target = $region24
      $region23: #{serialized_unpooling_forward.3} parent=5 // pred_region
        // Predicated region
        $region25: #{serialized_unpooling_forward.3} parent=23 // pred_check
          %p158 = pneg %p33
        $region26: #{serialized_unpooling_forward.3} parent=23 // pred_check_branch
          %160 = sbr.rel (%p158) target = $region28
        $region27: #{serialized_unpooling_forward.3} parent=23 // pred_region
          %s161 = smul.u32 2, %s13
          %s162 = ssub.s32 3, %s161
          %p163 = scmp.lt.s32.totalorder %s162, 2
          %s164 = scalar_select %p163, %s162, 2
          %s165 = smul.u32 16, %s164
          %p166 = scmp.lt.s32.totalorder %s161, 2
          %s167 = scalar_select %p166, %s161, 2
          %s168 = scalar_lea.vmem %s0, %s167
          %s169 = smul.u32 2, %s13
          %s170 = ssub.s32 3, %s169
          %p171 = scmp.lt.s32.totalorder %s170, 2
          %s172 = scalar_select %p171, %s170, 2
          %s173 = smul.u32 16, %s172
        $region28: #{serialized_unpooling_forward.3} parent=23 // pred_fallthru
          _
        // Predicated region
        $region29: #{serialized_unpooling_forward.3} parent=23 // pred_check
          %p174 = pneg %p59
        $region30: #{serialized_unpooling_forward.3} parent=23 // pred_check_branch
          %176 = sbr.rel (%p174) target = $region32
        $region31: #{serialized_unpooling_forward.3} parent=23 // pred_region
          %s177 = smul.u32 32, %s13
          %s178 = ssub.s32 38, %s177
          %p179 = scmp.lt.s32.totalorder %s178, 32
          %s180 = scalar_select %p179, %s178, 32
          %s181 = smul.u32 128, %s180
          %p182 = scmp.lt.s32.totalorder %s177, 37
          %s183 = scalar_select %p182, %s177, 37
          %s184 = smul.addr %s183, 8
          %s185 = scalar_lea.vmem %s1, %s184
          %s186 = smul.u32 32, %s13
          %s187 = ssub.s32 38, %s186
          %p188 = scmp.lt.s32.totalorder %s187, 32
          %s189 = scalar_select %p188, %s187, 32
          %s190 = smul.u32 128, %s189
        $region32: #{serialized_unpooling_forward.3} parent=23 // pred_fallthru
          _
      $region24: #{serialized_unpooling_forward.3} parent=5 // pred_fallthru
        _
      %p191 = scmp.le.s32.totalorder 1, %s13
      %p192 = scmp.lt.s32.totalorder %s13, 3
      %p193 = pnand %p191, %p192
      %p194 = pneg %p193
      // Predicated region
      $region33: #{serialized_unpooling_forward.3} parent=5 // pred_check
        _
      $region34: #{serialized_unpooling_forward.3} parent=5 // pred_check_branch
        %196 = sbr.rel (%p193) target = $region36
      $region35: #{serialized_unpooling_forward.3} parent=5 // pred_region
        %s197 = ssub.s32 %s13, 1
        %s198 = smul.u32 2, %s18
        %s199 = ssub.s32 3, %s198
        %p200 = scmp.lt.s32.totalorder %s199, 2
        %s201 = scalar_select %p200, %s199, 2
        %s202 = smul.u32 16, %s201
        %p203 = scmp.lt.s32.totalorder %s198, 2
        %s204 = scalar_select %p203, %s198, 2
        %s205 = scalar_lea.vmem %s0, %s204
        %p206 = pneg %p39
        %p207 = pneg %p36
        %s208 = smul.u32 32, %s18
        %s209 = ssub.s32 38, %s208
        %p210 = scmp.lt.s32.totalorder %s209, 32
        %s211 = scalar_select %p210, %s209, 32
        %s212 = smul.u32 128, %s211
        %p213 = scmp.lt.s32.totalorder %s208, 37
        %s214 = scalar_select %p213, %s208, 37
        %s215 = smul.addr %s214, 8
        %s216 = scalar_lea.vmem %s1, %s215
        %p217 = pneg %p65
        %p218 = pneg %p62
        %p219 = pneg %p86
        %p220 = pneg %p83
        %p221 = pneg %p107
        %p222 = pneg %p104
        %p223 = pneg %p133
        %p224 = pneg %p130
        %s225 = sand.u32 %s120, 1
        %s226 = scalar_lea.sflag [#allocation3], %s225
        %s227 = sand.u32 %s120, 1
        %s228 = smul.addr %s227, 256
        %s229 = scalar_lea.vmem [#allocation2], %s228
        %s230 = smul.u32 2, %s18
        %s231 = ssub.s32 3, %s230
        %p232 = scmp.lt.s32.totalorder %s231, 2
        %s233 = scalar_select %p232, %s231, 2
        %s234 = smul.u32 16, %s233
        %p235 = scmp.lt.s32.totalorder %s230, 2
        %s236 = scalar_select %p235, %s230, 2
        %s237 = scalar_lea.vmem %s0, %s236
        %s238 = smul.u32 2, %s18
        %s239 = ssub.s32 3, %s238
        %p240 = scmp.lt.s32.totalorder %s239, 2
        %s241 = scalar_select %p240, %s239, 2
        %s242 = smul.u32 16, %s241
        %s243 = smul.u32 32, %s18
        %s244 = ssub.s32 38, %s243
        %p245 = scmp.lt.s32.totalorder %s244, 32
        %s246 = scalar_select %p245, %s244, 32
        %s247 = smul.u32 128, %s246
        %p248 = scmp.lt.s32.totalorder %s243, 37
        %s249 = scalar_select %p248, %s243, 37
        %s250 = smul.addr %s249, 8
        %s251 = scalar_lea.vmem %s1, %s250
        %s252 = smul.u32 32, %s18
        %s253 = ssub.s32 38, %s252
        %p254 = scmp.lt.s32.totalorder %s253, 32
        %s255 = scalar_select %p254, %s253, 32
        %s256 = smul.u32 128, %s255
        %s257 = smul.u32 32, %s18
        %s258 = ssub.s32 38, %s257
        %p259 = scmp.lt.s32.totalorder %s258, 32
        %s260 = scalar_select %p259, %s258, 32
        %s261 = smul.u32 128, %s260
        %v262 = vld [vmem:[%s237] sm:$0x3]
        %v263 = vlaneseq
        %v264 = vshrl.u32 %v263, 7
        %v265 = vadd.s32 %v264, 8
        %v266 = vadd.s32 %v264, 16
        %v267 = vadd.s32 %v264, 24
        %v268 = vadd.s32 %v264, 32
        %v269 = vlaneseq
        %v270 = vshrl.u32 %v269, 7
        %v271 = vsub.s32 0, %v270
        %v272 = vrot.slane %v262, %v271
        %v273 = vlaneseq
        %v274 = vshrl.u32 %v273, 7
        %v275 = vsub.s32 1, %v274
        %v276 = vrot.slane %v262, %v275
        %vm277 = vcmp.eq.s32.totalorder %v264, %v272
        %vm278 = vcmp.eq.s32.totalorder %v264, %v276
        %vm279 = vcmp.eq.s32.totalorder %v265, %v272
        %vm280 = vcmp.eq.s32.totalorder %v265, %v276
        %vm281 = vcmp.eq.s32.totalorder %v266, %v272
        %vm282 = vcmp.eq.s32.totalorder %v266, %v276
        %vm283 = vcmp.eq.s32.totalorder %v267, %v272
        %vm284 = vcmp.eq.s32.totalorder %v267, %v276
        %vm285 = vcmp.eq.s32.totalorder %v268, %v272
        %vm286 = vcmp.eq.s32.totalorder %v268, %v276
        %v287 = vsel %vm277, 1, 0
        %v288 = vsel %vm278, 1, 0
        %v289 = vsel %vm279, 1, 0
        %v290 = vsel %vm280, 1, 0
        %v291 = vsel %vm281, 1, 0
        %v292 = vsel %vm282, 1, 0
        %v293 = vsel %vm283, 1, 0
        %v294 = vsel %vm284, 1, 0
        %v295 = vsel %vm285, 1, 0
        %v296 = vsel %vm286, 1, 0
        %v297 = vcvt.s32.f32 %v287
        %v298 = vcvt.s32.f32 %v288
        %v299 = vcvt.s32.f32 %v289
        %v300 = vcvt.s32.f32 %v290
        %v301 = vcvt.s32.f32 %v291
        %v302 = vcvt.s32.f32 %v292
        %v303 = vcvt.s32.f32 %v293
        %v304 = vcvt.s32.f32 %v294
        %v305 = vcvt.s32.f32 %v295
        %v306 = vcvt.s32.f32 %v296
        %v307 = vld [vmem:[%s2] sm:$0xff]
        %v308 = vld [vmem:[%s2 + $0x8] sm:$0xff]
        %v309 = vld [vmem:[%s2 + $0x10] sm:$0xff]
        %v310 = vld [vmem:[%s2 + $0x18] sm:$0xff]
        %v311 = vld [vmem:[%s2 + $0x20] sm:$0xff]
        %312 = vxpose.xlu0.b32.start [1/16] %v297, 128
        %313 = vxpose.xlu0.b32.cont [2/16] %v299, 128
        %314 = vxpose.xlu0.b32.cont [3/16] %v301, 128
        %315 = vxpose.xlu0.b32.cont [4/16] %v303, 128
        %316 = vxpose.xlu0.b32.cont [5/16] %v305, 128
        %317 = vxpose.xlu0.b32.cont [6/16] 0.0, 128
        %318 = vxpose.xlu0.b32.cont [7/16] 0.0, 128
        %319 = vxpose.xlu0.b32.cont [8/16] 0.0, 128
        %320 = vxpose.xlu0.b32.cont [9/16] 0.0, 128
        %321 = vxpose.xlu0.b32.cont [10/16] 0.0, 128
        %322 = vxpose.xlu0.b32.cont [11/16] 0.0, 128
        %323 = vxpose.xlu0.b32.cont [12/16] 0.0, 128
        %324 = vxpose.xlu0.b32.cont [13/16] 0.0, 128
        %325 = vxpose.xlu0.b32.cont [14/16] 0.0, 128
        %326 = vxpose.xlu0.b32.cont [15/16] 0.0, 128
        %327 = vxpose.xlu0.b32.end [16/16] 0.0, 128
        %v328 = vpop.trf.xlu0
        %v329 = vpop.trf.xlu0
        %v330 = vpop.trf.xlu0
        %v331 = vpop.trf.xlu0
        %v332 = vpop.trf.xlu0
        %v333 = vpop.trf.xlu0
        %v334 = vpop.trf.xlu0
        %v335 = vpop.trf.xlu0
        %v336 = vpop.trf.xlu0
        %v337 = vpop.trf.xlu0
        %v338 = vpop.trf.xlu0
        %v339 = vpop.trf.xlu0
        %v340 = vpop.trf.xlu0
        %v341 = vpop.trf.xlu0
        %v342 = vpop.trf.xlu0
        %v343 = vpop.trf.xlu0
        %344 = vxpose.xlu0.b32.start [1/16] %v298, 128
        %345 = vxpose.xlu0.b32.cont [2/16] %v300, 128
        %346 = vxpose.xlu0.b32.cont [3/16] %v302, 128
        %347 = vxpose.xlu0.b32.cont [4/16] %v304, 128
        %348 = vxpose.xlu0.b32.cont [5/16] %v306, 128
        %349 = vxpose.xlu0.b32.cont [6/16] 0.0, 128
        %350 = vxpose.xlu0.b32.cont [7/16] 0.0, 128
        %351 = vxpose.xlu0.b32.cont [8/16] 0.0, 128
        %352 = vxpose.xlu0.b32.cont [9/16] 0.0, 128
        %353 = vxpose.xlu0.b32.cont [10/16] 0.0, 128
        %354 = vxpose.xlu0.b32.cont [11/16] 0.0, 128
        %355 = vxpose.xlu0.b32.cont [12/16] 0.0, 128
        %356 = vxpose.xlu0.b32.cont [13/16] 0.0, 128
        %357 = vxpose.xlu0.b32.cont [14/16] 0.0, 128
        %358 = vxpose.xlu0.b32.cont [15/16] 0.0, 128
        %359 = vxpose.xlu0.b32.end [16/16] 0.0, 128
        %v360 = vpop.trf.xlu0
        %v361 = vpop.trf.xlu0
        %v362 = vpop.trf.xlu0
        %v363 = vpop.trf.xlu0
        %v364 = vpop.trf.xlu0
        %v365 = vpop.trf.xlu0
        %v366 = vpop.trf.xlu0
        %v367 = vpop.trf.xlu0
        %v368 = vpop.trf.xlu0
        %v369 = vpop.trf.xlu0
        %v370 = vpop.trf.xlu0
        %v371 = vpop.trf.xlu0
        %v372 = vpop.trf.xlu0
        %v373 = vpop.trf.xlu0
        %v374 = vpop.trf.xlu0
        %v375 = vpop.trf.xlu0
        %vm376 = vcmask 326656
        %v378 = vsel %vm376, %v328, 0
        %v381 = vsel %vm376, %v329, 0
        %v384 = vsel %vm376, %v330, 0
        %v387 = vsel %vm376, %v331, 0
        %v390 = vsel %vm376, %v332, 0
        %v393 = vsel %vm376, %v333, 0
        %v396 = vsel %vm376, %v334, 0
        %v399 = vsel %vm376, %v335, 0
        %v402 = vsel %vm376, %v336, 0
        %v405 = vsel %vm376, %v337, 0
        %v408 = vsel %vm376, %v338, 0
        %v411 = vsel %vm376, %v339, 0
        %v414 = vsel %vm376, %v340, 0
        %v417 = vsel %vm376, %v341, 0
        %v420 = vsel %vm376, %v342, 0
        %v423 = vsel %vm376, %v343, 0
        %v426 = vsel %vm376, %v360, 0
        %v429 = vsel %vm376, %v361, 0
        %v432 = vsel %vm376, %v362, 0
        %v435 = vsel %vm376, %v363, 0
        %v438 = vsel %vm376, %v364, 0
        %v441 = vsel %vm376, %v365, 0
        %v444 = vsel %vm376, %v366, 0
        %v447 = vsel %vm376, %v367, 0
        %v450 = vsel %vm376, %v368, 0
        %v453 = vsel %vm376, %v369, 0
        %v456 = vsel %vm376, %v370, 0
        %v459 = vsel %vm376, %v371, 0
        %v462 = vsel %vm376, %v372, 0
        %v465 = vsel %vm376, %v373, 0
        %v468 = vsel %vm376, %v374, 0
        %v471 = vsel %vm376, %v375, 0
        %473 = vmatprep.subr.mxu0 0.0
        %v474 = vand.u32 %v307, 4294901760
        %475 = vmatpush1.msra.mxu0 %v474
        %476 = vmatprep.subr.mxu0 0.0
        %v477 = vand.u32 %v308, 4294901760
        %478 = vmatpush1.msra.mxu0 %v477
        %479 = vmatprep.subr.mxu0 0.0
        %v480 = vand.u32 %v309, 4294901760
        %481 = vmatpush1.msra.mxu0 %v480
        %482 = vmatprep.subr.mxu0 0.0
        %v483 = vand.u32 %v310, 4294901760
        %484 = vmatpush1.msra.mxu0 %v483
        %485 = vmatprep.subr.mxu0 0.0
        %v486 = vand.u32 %v311, 4294901760
        %487 = vmatpush1.msra.mxu0 %v486
        %488 = vmatprep.subr.mxu0 0.0
        %489 = vmatpush1.msra.mxu0 0.0
        %490 = vmatprep.subr.mxu0 0.0
        %491 = vmatpush1.msra.mxu0 0.0
        %492 = vmatprep.subr.mxu0 0.0
        %493 = vmatpush1.msra.mxu0 0.0
        %494 = vmatprep.subr.mxu0 0.0
        %495 = vmatpush1.msra.mxu0 0.0
        %496 = vmatprep.subr.mxu0 0.0
        %497 = vmatpush1.msra.mxu0 0.0
        %498 = vmatprep.subr.mxu0 0.0
        %499 = vmatpush1.msra.mxu0 0.0
        %500 = vmatprep.subr.mxu0 0.0
        %501 = vmatpush1.msra.mxu0 0.0
        %502 = vmatprep.subr.mxu0 0.0
        %503 = vmatpush1.msra.mxu0 0.0
        %504 = vmatprep.subr.mxu0 0.0
        %505 = vmatpush1.msra.mxu0 0.0
        %506 = vmatprep.subr.mxu0 0.0
        %507 = vmatpush1.msra.mxu0 0.0
        %508 = vmatprep.subr.mxu0 0.0
        %509 = vmatpush1.msra.mxu0 0.0
        %510 = vmatprep.subr.mxu0 0.0
        %511 = vmatpush1.msra.mxu0 0.0
        %512 = vmatprep.subr.mxu0 0.0
        %513 = vmatpush1.msra.mxu0 0.0
        %514 = vmatprep.subr.mxu0 0.0
        %515 = vmatpush1.msra.mxu0 0.0
        %516 = vmatprep.subr.mxu0 0.0
        %517 = vmatpush1.msra.mxu0 0.0
        %518 = vmatprep.subr.mxu0 0.0
        %519 = vmatpush1.msra.mxu0 0.0
        %520 = vmatprep.subr.mxu0 0.0
        %521 = vmatpush1.msra.mxu0 0.0
        %522 = vmatprep.subr.mxu0 0.0
        %523 = vmatpush1.msra.mxu0 0.0
        %524 = vmatprep.subr.mxu0 0.0
        %525 = vmatpush1.msra.mxu0 0.0
        %526 = vmatprep.subr.mxu0 0.0
        %527 = vmatpush1.msra.mxu0 0.0
        %528 = vmatprep.subr.mxu0 0.0
        %529 = vmatpush1.msra.mxu0 0.0
        %530 = vmatprep.subr.mxu0 0.0
        %531 = vmatpush1.msra.mxu0 0.0
        %532 = vmatprep.subr.mxu0 0.0
        %533 = vmatpush1.msra.mxu0 0.0
        %534 = vmatprep.subr.mxu0 0.0
        %535 = vmatpush1.msra.mxu0 0.0
        %536 = vmatprep.subr.mxu0 0.0
        %537 = vmatpush1.msra.mxu0 0.0
        %538 = vmatprep.subr.mxu0 0.0
        %539 = vmatpush1.msra.mxu0 0.0
        %540 = vmatprep.subr.mxu0 0.0
        %541 = vmatpush1.msra.mxu0 0.0
        %542 = vmatprep.mubr.f32.mxu0 0.0
        %v543 = vand.u32 %v378, 4294901760
        %v544 = vsub.f32 %v378, %v543
        %v545 = vand.u32 %v544, 4294901760
        %v546 = vsub.f32 %v544, %v545
        %v547 = vand.u32 %v546, 4294901760
        %548 = vmatmul.mubr.f32.gmra.mrb[0].mxu0 %v547
        %v549 = vpop.f32.mrb[0].mxu0
        %v550 = vadd.f32 0.0, %v549
        %v551 = vpop.f32.mrb[0].mxu0
        %552 = vmatprep.mubr.f32.mxu0 0.0
        %v553 = vand.u32 %v381, 4294901760
        %v554 = vsub.f32 %v381, %v553
        %v555 = vand.u32 %v554, 4294901760
        %v556 = vsub.f32 %v554, %v555
        %v557 = vand.u32 %v556, 4294901760
        %558 = vmatmul.mubr.f32.gmra.mrb[0].mxu0 %v557
        %v559 = vpop.f32.mrb[0].mxu0
        %v560 = vadd.f32 0.0, %v559
        %v561 = vpop.f32.mrb[0].mxu0
        %562 = vmatprep.mubr.f32.mxu0 0.0
        %v563 = vand.u32 %v384, 4294901760
        %v564 = vsub.f32 %v384, %v563
        %v565 = vand.u32 %v564, 4294901760
        %v566 = vsub.f32 %v564, %v565
        %v567 = vand.u32 %v566, 4294901760
        %568 = vmatmul.mubr.f32.gmra.mrb[0].mxu0 %v567
        %v569 = vpop.f32.mrb[0].mxu0
        %v570 = vadd.f32 0.0, %v569
        %v571 = vpop.f32.mrb[0].mxu0
        %572 = vmatprep.mubr.f32.mxu0 0.0
        %v573 = vand.u32 %v387, 4294901760
        %v574 = vsub.f32 %v387, %v573
        %v575 = vand.u32 %v574, 4294901760
        %v576 = vsub.f32 %v574, %v575
        %v577 = vand.u32 %v576, 4294901760
        %578 = vmatmul.mubr.f32.gmra.mrb[0].mxu0 %v577
        %v579 = vpop.f32.mrb[0].mxu0
        %v580 = vadd.f32 0.0, %v579
        %v581 = vpop.f32.mrb[0].mxu0
        %582 = vmatprep.mubr.f32.mxu0 0.0
        %v583 = vand.u32 %v390, 4294901760
        %v584 = vsub.f32 %v390, %v583
        %v585 = vand.u32 %v584, 4294901760
        %v586 = vsub.f32 %v584, %v585
        %v587 = vand.u32 %v586, 4294901760
        %588 = vmatmul.mubr.f32.gmra.mrb[0].mxu0 %v587
        %v589 = vpop.f32.mrb[0].mxu0
        %v590 = vadd.f32 0.0, %v589
        %v591 = vpop.f32.mrb[0].mxu0
        %592 = vmatprep.mubr.f32.mxu0 0.0
        %v593 = vand.u32 %v393, 4294901760
        %v594 = vsub.f32 %v393, %v593
        %v595 = vand.u32 %v594, 4294901760
        %v596 = vsub.f32 %v594, %v595
        %v597 = vand.u32 %v596, 4294901760
        %598 = vmatmul.mubr.f32.gmra.mrb[0].mxu0 %v597
        %v599 = vpop.f32.mrb[0].mxu0
        %v600 = vadd.f32 0.0, %v599
        %v601 = vpop.f32.mrb[0].mxu0
        %602 = vmatprep.mubr.f32.mxu0 0.0
        %v603 = vand.u32 %v396, 4294901760
        %v604 = vsub.f32 %v396, %v603
        %v605 = vand.u32 %v604, 4294901760
        %v606 = vsub.f32 %v604, %v605
        %v607 = vand.u32 %v606, 4294901760
        %608 = vmatmul.mubr.f32.gmra.mrb[0].mxu0 %v607
        %v609 = vpop.f32.mrb[0].mxu0
        %v610 = vadd.f32 0.0, %v609
        %v611 = vpop.f32.mrb[0].mxu0
        %612 = vmatprep.mubr.f32.mxu0 0.0
        %v613 = vand.u32 %v399, 4294901760
        %v614 = vsub.f32 %v399, %v613
        %v615 = vand.u32 %v614, 4294901760
        %v616 = vsub.f32 %v614, %v615
        %v617 = vand.u32 %v616, 4294901760
        %618 = vmatmul.mubr.f32.gmra.mrb[0].mxu0 %v617
        %v619 = vpop.f32.mrb[0].mxu0
        %v620 = vadd.f32 0.0, %v619
        %v621 = vpop.f32.mrb[0].mxu0
        %622 = vmatprep.mubr.f32.mxu0 0.0
        %v623 = vand.u32 %v402, 4294901760
        %v624 = vsub.f32 %v402, %v623
        %v625 = vand.u32 %v624, 4294901760
        %v626 = vsub.f32 %v624, %v625
        %v627 = vand.u32 %v626, 4294901760
        %628 = vmatmul.mubr.f32.gmra.mrb[0].mxu0 %v627
        %v629 = vpop.f32.mrb[0].mxu0
        %v630 = vadd.f32 0.0, %v629
        %v631 = vpop.f32.mrb[0].mxu0
        %632 = vmatprep.mubr.f32.mxu0 0.0
        %v633 = vand.u32 %v405, 4294901760
        %v634 = vsub.f32 %v405, %v633
        %v635 = vand.u32 %v634, 4294901760
        %v636 = vsub.f32 %v634, %v635
        %v637 = vand.u32 %v636, 4294901760
        %638 = vmatmul.mubr.f32.gmra.mrb[0].mxu0 %v637
        %v639 = vpop.f32.mrb[0].mxu0
        %v640 = vadd.f32 0.0, %v639
        %v641 = vpop.f32.mrb[0].mxu0
        %642 = vmatprep.mubr.f32.mxu0 0.0
        %v643 = vand.u32 %v408, 4294901760
        %v644 = vsub.f32 %v408, %v643
        %v645 = vand.u32 %v644, 4294901760
        %v646 = vsub.f32 %v644, %v645
        %v647 = vand.u32 %v646, 4294901760
        %648 = vmatmul.mubr.f32.gmra.mrb[0].mxu0 %v647
        %v649 = vpop.f32.mrb[0].mxu0
        %v650 = vadd.f32 0.0, %v649
        %v651 = vpop.f32.mrb[0].mxu0
        %652 = vmatprep.mubr.f32.mxu0 0.0
        %v653 = vand.u32 %v411, 4294901760
        %v654 = vsub.f32 %v411, %v653
        %v655 = vand.u32 %v654, 4294901760
        %v656 = vsub.f32 %v654, %v655
        %v657 = vand.u32 %v656, 4294901760
        %658 = vmatmul.mubr.f32.gmra.mrb[0].mxu0 %v657
        %v659 = vpop.f32.mrb[0].mxu0
        %v660 = vadd.f32 0.0, %v659
        %v661 = vpop.f32.mrb[0].mxu0
        %662 = vmatprep.mubr.f32.mxu0 0.0
        %v663 = vand.u32 %v414, 4294901760
        %v664 = vsub.f32 %v414, %v663
        %v665 = vand.u32 %v664, 4294901760
        %v666 = vsub.f32 %v664, %v665
        %v667 = vand.u32 %v666, 4294901760
        %668 = vmatmul.mubr.f32.gmra.mrb[0].mxu0 %v667
        %v669 = vpop.f32.mrb[0].mxu0
        %v670 = vadd.f32 0.0, %v669
        %v671 = vpop.f32.mrb[0].mxu0
        %672 = vmatprep.mubr.f32.mxu0 0.0
        %v673 = vand.u32 %v417, 4294901760
        %v674 = vsub.f32 %v417, %v673
        %v675 = vand.u32 %v674, 4294901760
        %v676 = vsub.f32 %v674, %v675
        %v677 = vand.u32 %v676, 4294901760
        %678 = vmatmul.mubr.f32.gmra.mrb[0].mxu0 %v677
        %v679 = vpop.f32.mrb[0].mxu0
        %v680 = vadd.f32 0.0, %v679
        %v681 = vpop.f32.mrb[0].mxu0
        %682 = vmatprep.mubr.f32.mxu0 0.0
        %v683 = vand.u32 %v420, 4294901760
        %v684 = vsub.f32 %v420, %v683
        %v685 = vand.u32 %v684, 4294901760
        %v686 = vsub.f32 %v684, %v685
        %v687 = vand.u32 %v686, 4294901760
        %688 = vmatmul.mubr.f32.gmra.mrb[0].mxu0 %v687
        %v689 = vpop.f32.mrb[0].mxu0
        %v690 = vadd.f32 0.0, %v689
        %v691 = vpop.f32.mrb[0].mxu0
        %692 = vmatprep.mubr.f32.mxu0 0.0
        %v693 = vand.u32 %v423, 4294901760
        %v694 = vsub.f32 %v423, %v693
        %v695 = vand.u32 %v694, 4294901760
        %v696 = vsub.f32 %v694, %v695
        %v697 = vand.u32 %v696, 4294901760
        %698 = vmatmul.mubr.f32.gmra.mrb[0].mxu0 %v697
        %v699 = vpop.f32.mrb[0].mxu0
        %v700 = vadd.f32 0.0, %v699
        %v701 = vpop.f32.mrb[0].mxu0
        %702 = vmatprep.mubr.f32.mxu0 0.0
        %v703 = vand.u32 %v426, 4294901760
        %v704 = vsub.f32 %v426, %v703
        %v705 = vand.u32 %v704, 4294901760
        %v706 = vsub.f32 %v704, %v705
        %v707 = vand.u32 %v706, 4294901760
        %708 = vmatmul.mubr.f32.gmra.mrb[0].mxu0 %v707
        %v709 = vpop.f32.mrb[0].mxu0
        %v710 = vadd.f32 0.0, %v709
        %v711 = vpop.f32.mrb[0].mxu0
        %712 = vmatprep.mubr.f32.mxu0 0.0
        %v713 = vand.u32 %v429, 4294901760
        %v714 = vsub.f32 %v429, %v713
        %v715 = vand.u32 %v714, 4294901760
        %v716 = vsub.f32 %v714, %v715
        %v717 = vand.u32 %v716, 4294901760
        %718 = vmatmul.mubr.f32.gmra.mrb[0].mxu0 %v717
        %v719 = vpop.f32.mrb[0].mxu0
        %v720 = vadd.f32 0.0, %v719
        %v721 = vpop.f32.mrb[0].mxu0
        %722 = vmatprep.mubr.f32.mxu0 0.0
        %v723 = vand.u32 %v432, 4294901760
        %v724 = vsub.f32 %v432, %v723
        %v725 = vand.u32 %v724, 4294901760
        %v726 = vsub.f32 %v724, %v725
        %v727 = vand.u32 %v726, 4294901760
        %728 = vmatmul.mubr.f32.gmra.mrb[0].mxu0 %v727
        %v729 = vpop.f32.mrb[0].mxu0
        %v730 = vadd.f32 0.0, %v729
        %v731 = vpop.f32.mrb[0].mxu0
        %732 = vmatprep.mubr.f32.mxu0 0.0
        %v733 = vand.u32 %v435, 4294901760
        %v734 = vsub.f32 %v435, %v733
        %v735 = vand.u32 %v734, 4294901760
        %v736 = vsub.f32 %v734, %v735
        %v737 = vand.u32 %v736, 4294901760
        %738 = vmatmul.mubr.f32.gmra.mrb[0].mxu0 %v737
        %v739 = vpop.f32.mrb[0].mxu0
        %v740 = vadd.f32 0.0, %v739
        %v741 = vpop.f32.mrb[0].mxu0
        %742 = vmatprep.mubr.f32.mxu0 0.0
        %v743 = vand.u32 %v438, 4294901760
        %v744 = vsub.f32 %v438, %v743
        %v745 = vand.u32 %v744, 4294901760
        %v746 = vsub.f32 %v744, %v745
        %v747 = vand.u32 %v746, 4294901760
        %748 = vmatmul.mubr.f32.gmra.mrb[0].mxu0 %v747
        %v749 = vpop.f32.mrb[0].mxu0
        %v750 = vadd.f32 0.0, %v749
        %v751 = vpop.f32.mrb[0].mxu0
        %752 = vmatprep.mubr.f32.mxu0 0.0
        %v753 = vand.u32 %v441, 4294901760
        %v754 = vsub.f32 %v441, %v753
        %v755 = vand.u32 %v754, 4294901760
        %v756 = vsub.f32 %v754, %v755
        %v757 = vand.u32 %v756, 4294901760
        %758 = vmatmul.mubr.f32.gmra.mrb[0].mxu0 %v757
        %v759 = vpop.f32.mrb[0].mxu0
        %v760 = vadd.f32 0.0, %v759
        %v761 = vpop.f32.mrb[0].mxu0
        %762 = vmatprep.mubr.f32.mxu0 0.0
        %v763 = vand.u32 %v444, 4294901760
        %v764 = vsub.f32 %v444, %v763
        %v765 = vand.u32 %v764, 4294901760
        %v766 = vsub.f32 %v764, %v765
        %v767 = vand.u32 %v766, 4294901760
        %768 = vmatmul.mubr.f32.gmra.mrb[0].mxu0 %v767
        %v769 = vpop.f32.mrb[0].mxu0
        %v770 = vadd.f32 0.0, %v769
        %v771 = vpop.f32.mrb[0].mxu0
        %772 = vmatprep.mubr.f32.mxu0 0.0
        %v773 = vand.u32 %v447, 4294901760
        %v774 = vsub.f32 %v447, %v773
        %v775 = vand.u32 %v774, 4294901760
        %v776 = vsub.f32 %v774, %v775
        %v777 = vand.u32 %v776, 4294901760
        %778 = vmatmul.mubr.f32.gmra.mrb[0].mxu0 %v777
        %v779 = vpop.f32.mrb[0].mxu0
        %v780 = vadd.f32 0.0, %v779
        %v781 = vpop.f32.mrb[0].mxu0
        %782 = vmatprep.mubr.f32.mxu0 0.0
        %v783 = vand.u32 %v450, 4294901760
        %v784 = vsub.f32 %v450, %v783
        %v785 = vand.u32 %v784, 4294901760
        %v786 = vsub.f32 %v784, %v785
        %v787 = vand.u32 %v786, 4294901760
        %788 = vmatmul.mubr.f32.gmra.mrb[0].mxu0 %v787
        %v789 = vpop.f32.mrb[0].mxu0
        %v790 = vadd.f32 0.0, %v789
        %v791 = vpop.f32.mrb[0].mxu0
        %792 = vmatprep.mubr.f32.mxu0 0.0
        %v793 = vand.u32 %v453, 4294901760
        %v794 = vsub.f32 %v453, %v793
        %v795 = vand.u32 %v794, 4294901760
        %v796 = vsub.f32 %v794, %v795
        %v797 = vand.u32 %v796, 4294901760
        %798 = vmatmul.mubr.f32.gmra.mrb[0].mxu0 %v797
        %v799 = vpop.f32.mrb[0].mxu0
        %v800 = vadd.f32 0.0, %v799
        %v801 = vpop.f32.mrb[0].mxu0
        %802 = vmatprep.mubr.f32.mxu0 0.0
        %v803 = vand.u32 %v456, 4294901760
        %v804 = vsub.f32 %v456, %v803
        %v805 = vand.u32 %v804, 4294901760
        %v806 = vsub.f32 %v804, %v805
        %v807 = vand.u32 %v806, 4294901760
        %808 = vmatmul.mubr.f32.gmra.mrb[0].mxu0 %v807
        %v809 = vpop.f32.mrb[0].mxu0
        %v810 = vadd.f32 0.0, %v809
        %v811 = vpop.f32.mrb[0].mxu0
        %812 = vmatprep.mubr.f32.mxu0 0.0
        %v813 = vand.u32 %v459, 4294901760
        %v814 = vsub.f32 %v459, %v813
        %v815 = vand.u32 %v814, 4294901760
        %v816 = vsub.f32 %v814, %v815
        %v817 = vand.u32 %v816, 4294901760
        %818 = vmatmul.mubr.f32.gmra.mrb[0].mxu0 %v817
        %v819 = vpop.f32.mrb[0].mxu0
        %v820 = vadd.f32 0.0, %v819
        %v821 = vpop.f32.mrb[0].mxu0
        %822 = vmatprep.mubr.f32.mxu0 0.0
        %v823 = vand.u32 %v462, 4294901760
        %v824 = vsub.f32 %v462, %v823
        %v825 = vand.u32 %v824, 4294901760
        %v826 = vsub.f32 %v824, %v825
        %v827 = vand.u32 %v826, 4294901760
        %828 = vmatmul.mubr.f32.gmra.mrb[0].mxu0 %v827
        %v829 = vpop.f32.mrb[0].mxu0
        %v830 = vadd.f32 0.0, %v829
        %v831 = vpop.f32.mrb[0].mxu0
        %832 = vmatprep.mubr.f32.mxu0 0.0
        %v833 = vand.u32 %v465, 4294901760
        %v834 = vsub.f32 %v465, %v833
        %v835 = vand.u32 %v834, 4294901760
        %v836 = vsub.f32 %v834, %v835
        %v837 = vand.u32 %v836, 4294901760
        %838 = vmatmul.mubr.f32.gmra.mrb[0].mxu0 %v837
        %v839 = vpop.f32.mrb[0].mxu0
        %v840 = vadd.f32 0.0, %v839
        %v841 = vpop.f32.mrb[0].mxu0
        %842 = vmatprep.mubr.f32.mxu0 0.0
        %v843 = vand.u32 %v468, 4294901760
        %v844 = vsub.f32 %v468, %v843
        %v845 = vand.u32 %v844, 4294901760
        %v846 = vsub.f32 %v844, %v845
        %v847 = vand.u32 %v846, 4294901760
        %848 = vmatmul.mubr.f32.gmra.mrb[0].mxu0 %v847
        %v849 = vpop.f32.mrb[0].mxu0
        %v850 = vadd.f32 0.0, %v849
        %v851 = vpop.f32.mrb[0].mxu0
        %852 = vmatprep.mubr.f32.mxu0 0.0
        %v853 = vand.u32 %v471, 4294901760
        %v854 = vsub.f32 %v471, %v853
        %v855 = vand.u32 %v854, 4294901760
        %v856 = vsub.f32 %v854, %v855
        %v857 = vand.u32 %v856, 4294901760
        %858 = vmatmul.mubr.f32.gmra.mrb[0].mxu0 %v857
        %v859 = vpop.f32.mrb[0].mxu0
        %v860 = vadd.f32 0.0, %v859
        %v861 = vpop.f32.mrb[0].mxu0
        %862 = vdwg.mxu0
        %863 = vmatprep.subr.mxu0 0.0
        %v864 = vand.u32 %v307, 4294901760
        %v865 = vsub.f32 %v307, %v864
        %v866 = vand.u32 %v865, 4294901760
        %v867 = vsub.f32 %v865, %v866
        %v868 = vand.u32 %v867, 4294901760
        %869 = vmatpush1.msra.mxu0 %v868
        %870 = vmatprep.subr.mxu0 0.0
        %v871 = vand.u32 %v308, 4294901760
        %v872 = vsub.f32 %v308, %v871
        %v873 = vand.u32 %v872, 4294901760
        %v874 = vsub.f32 %v872, %v873
        %v875 = vand.u32 %v874, 4294901760
        %876 = vmatpush1.msra.mxu0 %v875
        %877 = vmatprep.subr.mxu0 0.0
        %v878 = vand.u32 %v309, 4294901760
        %v879 = vsub.f32 %v309, %v878
        %v880 = vand.u32 %v879, 4294901760
        %v881 = vsub.f32 %v879, %v880
        %v882 = vand.u32 %v881, 4294901760
        %883 = vmatpush1.msra.mxu0 %v882
        %884 = vmatprep.subr.mxu0 0.0
        %v885 = vand.u32 %v310, 4294901760
        %v886 = vsub.f32 %v310, %v885
        %v887 = vand.u32 %v886, 4294901760
        %v888 = vsub.f32 %v886, %v887
        %v889 = vand.u32 %v888, 4294901760
        %890 = vmatpush1.msra.mxu0 %v889
        %891 = vmatprep.subr.mxu0 0.0
        %v892 = vand.u32 %v311, 4294901760
        %v893 = vsub.f32 %v311, %v892
        %v894 = vand.u32 %v893, 4294901760
        %v895 = vsub.f32 %v893, %v894
        %v896 = vand.u32 %v895, 4294901760
        %897 = vmatpush1.msra.mxu0 %v896
        %898 = vmatprep.subr.mxu0 0.0
        %899 = vmatpush1.msra.mxu0 0.0
        %900 = vmatprep.subr.mxu0 0.0
        %901 = vmatpush1.msra.mxu0 0.0
        %902 = vmatprep.subr.mxu0 0.0
        %903 = vmatpush1.msra.mxu0 0.0
        %904 = vmatprep.subr.mxu0 0.0
        %905 = vmatpush1.msra.mxu0 0.0
        %906 = vmatprep.subr.mxu0 0.0
        %907 = vmatpush1.msra.mxu0 0.0
        %908 = vmatprep.subr.mxu0 0.0
        %909 = vmatpush1.msra.mxu0 0.0
        %910 = vmatprep.subr.mxu0 0.0
        %911 = vmatpush1.msra.mxu0 0.0
        %912 = vmatprep.subr.mxu0 0.0
        %913 = vmatpush1.msra.mxu0 0.0
        %914 = vmatprep.subr.mxu0 0.0
        %915 = vmatpush1.msra.mxu0 0.0
        %916 = vmatprep.subr.mxu0 0.0
        %917 = vmatpush1.msra.mxu0 0.0
        %918 = vmatprep.subr.mxu0 0.0
        %919 = vmatpush1.msra.mxu0 0.0
        %920 = vmatprep.subr.mxu0 0.0
        %921 = vmatpush1.msra.mxu0 0.0
        %922 = vmatprep.subr.mxu0 0.0
        %923 = vmatpush1.msra.mxu0 0.0
        %924 = vmatprep.subr.mxu0 0.0
        %925 = vmatpush1.msra.mxu0 0.0
        %926 = vmatprep.subr.mxu0 0.0
        %927 = vmatpush1.msra.mxu0 0.0
        %928 = vmatprep.subr.mxu0 0.0
        %929 = vmatpush1.msra.mxu0 0.0
        %930 = vmatprep.subr.mxu0 0.0
        %931 = vmatpush1.msra.mxu0 0.0
        %932 = vmatprep.subr.mxu0 0.0
        %933 = vmatpush1.msra.mxu0 0.0
        %934 = vmatprep.subr.mxu0 0.0
        %935 = vmatpush1.msra.mxu0 0.0
        %936 = vmatprep.subr.mxu0 0.0
        %937 = vmatpush1.msra.mxu0 0.0
        %938 = vmatprep.subr.mxu0 0.0
        %939 = vmatpush1.msra.mxu0 0.0
        %940 = vmatprep.subr.mxu0 0.0
        %941 = vmatpush1.msra.mxu0 0.0
        %942 = vmatprep.subr.mxu0 0.0
        %943 = vmatpush1.msra.mxu0 0.0
        %944 = vmatprep.subr.mxu0 0.0
        %945 = vmatpush1.msra.mxu0 0.0
        %946 = vmatprep.subr.mxu0 0.0
        %947 = vmatpush1.msra.mxu0 0.0
        %948 = vmatprep.subr.mxu0 0.0
        %949 = vmatpush1.msra.mxu0 0.0
        %950 = vmatprep.subr.mxu0 0.0
        %951 = vmatpush1.msra.mxu0 0.0
        %952 = vmatprep.mubr.f32.mxu0 0.0
        %v953 = vand.u32 %v378, 4294901760
        %954 = vmatmul.mubr.f32.gmra.mrb[0].mxu0 %v953
        %v955 = vpop.f32.mrb[0].mxu0
        %v956 = vadd.f32 %v550, %v955
        %v957 = vpop.f32.mrb[0].mxu0
        %958 = vmatprep.mubr.f32.mxu0 0.0
        %v959 = vand.u32 %v381, 4294901760
        %960 = vmatmul.mubr.f32.gmra.mrb[0].mxu0 %v959
        %v961 = vpop.f32.mrb[0].mxu0
        %v962 = vadd.f32 %v560, %v961
        %v963 = vpop.f32.mrb[0].mxu0
        %964 = vmatprep.mubr.f32.mxu0 0.0
        %v965 = vand.u32 %v384, 4294901760
        %966 = vmatmul.mubr.f32.gmra.mrb[0].mxu0 %v965
        %v967 = vpop.f32.mrb[0].mxu0
        %v968 = vadd.f32 %v570, %v967
        %v969 = vpop.f32.mrb[0].mxu0
        %970 = vmatprep.mubr.f32.mxu0 0.0
        %v971 = vand.u32 %v387, 4294901760
        %972 = vmatmul.mubr.f32.gmra.mrb[0].mxu0 %v971
        %v973 = vpop.f32.mrb[0].mxu0
        %v974 = vadd.f32 %v580, %v973
        %v975 = vpop.f32.mrb[0].mxu0
        %976 = vmatprep.mubr.f32.mxu0 0.0
        %v977 = vand.u32 %v390, 4294901760
        %978 = vmatmul.mubr.f32.gmra.mrb[0].mxu0 %v977
        %v979 = vpop.f32.mrb[0].mxu0
        %v980 = vadd.f32 %v590, %v979
        %v981 = vpop.f32.mrb[0].mxu0
        %982 = vmatprep.mubr.f32.mxu0 0.0
        %v983 = vand.u32 %v393, 4294901760
        %984 = vmatmul.mubr.f32.gmra.mrb[0].mxu0 %v983
        %v985 = vpop.f32.mrb[0].mxu0
        %v986 = vadd.f32 %v600, %v985
        %v987 = vpop.f32.mrb[0].mxu0
        %988 = vmatprep.mubr.f32.mxu0 0.0
        %v989 = vand.u32 %v396, 4294901760
        %990 = vmatmul.mubr.f32.gmra.mrb[0].mxu0 %v989
        %v991 = vpop.f32.mrb[0].mxu0
        %v992 = vadd.f32 %v610, %v991
        %v993 = vpop.f32.mrb[0].mxu0
        %994 = vmatprep.mubr.f32.mxu0 0.0
        %v995 = vand.u32 %v399, 4294901760
        %996 = vmatmul.mubr.f32.gmra.mrb[0].mxu0 %v995
        %v997 = vpop.f32.mrb[0].mxu0
        %v998 = vadd.f32 %v620, %v997
        %v999 = vpop.f32.mrb[0].mxu0
        %1000 = vmatprep.mubr.f32.mxu0 0.0
        %v1001 = vand.u32 %v402, 4294901760
        %1002 = vmatmul.mubr.f32.gmra.mrb[0].mxu0 %v1001
        %v1003 = vpop.f32.mrb[0].mxu0
        %v1004 = vadd.f32 %v630, %v1003
        %v1005 = vpop.f32.mrb[0].mxu0
        %1006 = vmatprep.mubr.f32.mxu0 0.0
        %v1007 = vand.u32 %v405, 4294901760
        %1008 = vmatmul.mubr.f32.gmra.mrb[0].mxu0 %v1007
        %v1009 = vpop.f32.mrb[0].mxu0
        %v1010 = vadd.f32 %v640, %v1009
        %v1011 = vpop.f32.mrb[0].mxu0
        %1012 = vmatprep.mubr.f32.mxu0 0.0
        %v1013 = vand.u32 %v408, 4294901760
        %1014 = vmatmul.mubr.f32.gmra.mrb[0].mxu0 %v1013
        %v1015 = vpop.f32.mrb[0].mxu0
        %v1016 = vadd.f32 %v650, %v1015
        %v1017 = vpop.f32.mrb[0].mxu0
        %1018 = vmatprep.mubr.f32.mxu0 0.0
        %v1019 = vand.u32 %v411, 4294901760
        %1020 = vmatmul.mubr.f32.gmra.mrb[0].mxu0 %v1019
        %v1021 = vpop.f32.mrb[0].mxu0
        %v1022 = vadd.f32 %v660, %v1021
        %v1023 = vpop.f32.mrb[0].mxu0
        %1024 = vmatprep.mubr.f32.mxu0 0.0
        %v1025 = vand.u32 %v414, 4294901760
        %1026 = vmatmul.mubr.f32.gmra.mrb[0].mxu0 %v1025
        %v1027 = vpop.f32.mrb[0].mxu0
        %v1028 = vadd.f32 %v670, %v1027
        %v1029 = vpop.f32.mrb[0].mxu0
        %1030 = vmatprep.mubr.f32.mxu0 0.0
        %v1031 = vand.u32 %v417, 4294901760
        %1032 = vmatmul.mubr.f32.gmra.mrb[0].mxu0 %v1031
        %v1033 = vpop.f32.mrb[0].mxu0
        %v1034 = vadd.f32 %v680, %v1033
        %v1035 = vpop.f32.mrb[0].mxu0
        %1036 = vmatprep.mubr.f32.mxu0 0.0
        %v1037 = vand.u32 %v420, 4294901760
        %1038 = vmatmul.mubr.f32.gmra.mrb[0].mxu0 %v1037
        %v1039 = vpop.f32.mrb[0].mxu0
        %v1040 = vadd.f32 %v690, %v1039
        %v1041 = vpop.f32.mrb[0].mxu0
        %1042 = vmatprep.mubr.f32.mxu0 0.0
        %v1043 = vand.u32 %v423, 4294901760
        %1044 = vmatmul.mubr.f32.gmra.mrb[0].mxu0 %v1043
        %v1045 = vpop.f32.mrb[0].mxu0
        %v1046 = vadd.f32 %v700, %v1045
        %v1047 = vpop.f32.mrb[0].mxu0
        %1048 = vmatprep.mubr.f32.mxu0 0.0
        %v1049 = vand.u32 %v426, 4294901760
        %1050 = vmatmul.mubr.f32.gmra.mrb[0].mxu0 %v1049
        %v1051 = vpop.f32.mrb[0].mxu0
        %v1052 = vadd.f32 %v710, %v1051
        %v1053 = vpop.f32.mrb[0].mxu0
        %1054 = vmatprep.mubr.f32.mxu0 0.0
        %v1055 = vand.u32 %v429, 4294901760
        %1056 = vmatmul.mubr.f32.gmra.mrb[0].mxu0 %v1055
        %v1057 = vpop.f32.mrb[0].mxu0
        %v1058 = vadd.f32 %v720, %v1057
        %v1059 = vpop.f32.mrb[0].mxu0
        %1060 = vmatprep.mubr.f32.mxu0 0.0
        %v1061 = vand.u32 %v432, 4294901760
        %1062 = vmatmul.mubr.f32.gmra.mrb[0].mxu0 %v1061
        %v1063 = vpop.f32.mrb[0].mxu0
        %v1064 = vadd.f32 %v730, %v1063
        %v1065 = vpop.f32.mrb[0].mxu0
        %1066 = vmatprep.mubr.f32.mxu0 0.0
        %v1067 = vand.u32 %v435, 4294901760
        %1068 = vmatmul.mubr.f32.gmra.mrb[0].mxu0 %v1067
        %v1069 = vpop.f32.mrb[0].mxu0
        %v1070 = vadd.f32 %v740, %v1069
        %v1071 = vpop.f32.mrb[0].mxu0
        %1072 = vmatprep.mubr.f32.mxu0 0.0
        %v1073 = vand.u32 %v438, 4294901760
        %1074 = vmatmul.mubr.f32.gmra.mrb[0].mxu0 %v1073
        %v1075 = vpop.f32.mrb[0].mxu0
        %v1076 = vadd.f32 %v750, %v1075
        %v1077 = vpop.f32.mrb[0].mxu0
        %1078 = vmatprep.mubr.f32.mxu0 0.0
        %v1079 = vand.u32 %v441, 4294901760
        %1080 = vmatmul.mubr.f32.gmra.mrb[0].mxu0 %v1079
        %v1081 = vpop.f32.mrb[0].mxu0
        %v1082 = vadd.f32 %v760, %v1081
        %v1083 = vpop.f32.mrb[0].mxu0
        %1084 = vmatprep.mubr.f32.mxu0 0.0
        %v1085 = vand.u32 %v444, 4294901760
        %1086 = vmatmul.mubr.f32.gmra.mrb[0].mxu0 %v1085
        %v1087 = vpop.f32.mrb[0].mxu0
        %v1088 = vadd.f32 %v770, %v1087
        %v1089 = vpop.f32.mrb[0].mxu0
        %1090 = vmatprep.mubr.f32.mxu0 0.0
        %v1091 = vand.u32 %v447, 4294901760
        %1092 = vmatmul.mubr.f32.gmra.mrb[0].mxu0 %v1091
        %v1093 = vpop.f32.mrb[0].mxu0
        %v1094 = vadd.f32 %v780, %v1093
        %v1095 = vpop.f32.mrb[0].mxu0
        %1096 = vmatprep.mubr.f32.mxu0 0.0
        %v1097 = vand.u32 %v450, 4294901760
        %1098 = vmatmul.mubr.f32.gmra.mrb[0].mxu0 %v1097
        %v1099 = vpop.f32.mrb[0].mxu0
        %v1100 = vadd.f32 %v790, %v1099
        %v1101 = vpop.f32.mrb[0].mxu0
        %1102 = vmatprep.mubr.f32.mxu0 0.0
        %v1103 = vand.u32 %v453, 4294901760
        %1104 = vmatmul.mubr.f32.gmra.mrb[0].mxu0 %v1103
        %v1105 = vpop.f32.mrb[0].mxu0
        %v1106 = vadd.f32 %v800, %v1105
        %v1107 = vpop.f32.mrb[0].mxu0
        %1108 = vmatprep.mubr.f32.mxu0 0.0
        %v1109 = vand.u32 %v456, 4294901760
        %1110 = vmatmul.mubr.f32.gmra.mrb[0].mxu0 %v1109
        %v1111 = vpop.f32.mrb[0].mxu0
        %v1112 = vadd.f32 %v810, %v1111
        %v1113 = vpop.f32.mrb[0].mxu0
        %1114 = vmatprep.mubr.f32.mxu0 0.0
        %v1115 = vand.u32 %v459, 4294901760
        %1116 = vmatmul.mubr.f32.gmra.mrb[0].mxu0 %v1115
        %v1117 = vpop.f32.mrb[0].mxu0
        %v1118 = vadd.f32 %v820, %v1117
        %v1119 = vpop.f32.mrb[0].mxu0
        %1120 = vmatprep.mubr.f32.mxu0 0.0
        %v1121 = vand.u32 %v462, 4294901760
        %1122 = vmatmul.mubr.f32.gmra.mrb[0].mxu0 %v1121
        %v1123 = vpop.f32.mrb[0].mxu0
        %v1124 = vadd.f32 %v830, %v1123
        %v1125 = vpop.f32.mrb[0].mxu0
        %1126 = vmatprep.mubr.f32.mxu0 0.0
        %v1127 = vand.u32 %v465, 4294901760
        %1128 = vmatmul.mubr.f32.gmra.mrb[0].mxu0 %v1127
        %v1129 = vpop.f32.mrb[0].mxu0
        %v1130 = vadd.f32 %v840, %v1129
        %v1131 = vpop.f32.mrb[0].mxu0
        %1132 = vmatprep.mubr.f32.mxu0 0.0
        %v1133 = vand.u32 %v468, 4294901760
        %1134 = vmatmul.mubr.f32.gmra.mrb[0].mxu0 %v1133
        %v1135 = vpop.f32.mrb[0].mxu0
        %v1136 = vadd.f32 %v850, %v1135
        %v1137 = vpop.f32.mrb[0].mxu0
        %1138 = vmatprep.mubr.f32.mxu0 0.0
        %v1139 = vand.u32 %v471, 4294901760
        %1140 = vmatmul.mubr.f32.gmra.mrb[0].mxu0 %v1139
        %v1141 = vpop.f32.mrb[0].mxu0
        %v1142 = vadd.f32 %v860, %v1141
        %v1143 = vpop.f32.mrb[0].mxu0
        %1144 = vdwg.mxu0
        %1145 = vmatprep.subr.mxu0 0.0
        %v1146 = vand.u32 %v307, 4294901760
        %v1147 = vsub.f32 %v307, %v1146
        %1148 = vmatpush1.msra.mxu0 %v1147
        %1149 = vmatprep.subr.mxu0 0.0
        %v1150 = vand.u32 %v308, 4294901760
        %v1151 = vsub.f32 %v308, %v1150
        %1152 = vmatpush1.msra.mxu0 %v1151
        %1153 = vmatprep.subr.mxu0 0.0
        %v1154 = vand.u32 %v309, 4294901760
        %v1155 = vsub.f32 %v309, %v1154
        %1156 = vmatpush1.msra.mxu0 %v1155
        %1157 = vmatprep.subr.mxu0 0.0
        %v1158 = vand.u32 %v310, 4294901760
        %v1159 = vsub.f32 %v310, %v1158
        %1160 = vmatpush1.msra.mxu0 %v1159
        %1161 = vmatprep.subr.mxu0 0.0
        %v1162 = vand.u32 %v311, 4294901760
        %v1163 = vsub.f32 %v311, %v1162
        %1164 = vmatpush1.msra.mxu0 %v1163
        %1165 = vmatprep.subr.mxu0 0.0
        %1166 = vmatpush1.msra.mxu0 0.0
        %1167 = vmatprep.subr.mxu0 0.0
        %1168 = vmatpush1.msra.mxu0 0.0
        %1169 = vmatprep.subr.mxu0 0.0
        %1170 = vmatpush1.msra.mxu0 0.0
        %1171 = vmatprep.subr.mxu0 0.0
        %1172 = vmatpush1.msra.mxu0 0.0
        %1173 = vmatprep.subr.mxu0 0.0
        %1174 = vmatpush1.msra.mxu0 0.0
        %1175 = vmatprep.subr.mxu0 0.0
        %1176 = vmatpush1.msra.mxu0 0.0
        %1177 = vmatprep.subr.mxu0 0.0
        %1178 = vmatpush1.msra.mxu0 0.0
        %1179 = vmatprep.subr.mxu0 0.0
        %1180 = vmatpush1.msra.mxu0 0.0
        %1181 = vmatprep.subr.mxu0 0.0
        %1182 = vmatpush1.msra.mxu0 0.0
        %1183 = vmatprep.subr.mxu0 0.0
        %1184 = vmatpush1.msra.mxu0 0.0
        %1185 = vmatprep.subr.mxu0 0.0
        %1186 = vmatpush1.msra.mxu0 0.0
        %1187 = vmatprep.subr.mxu0 0.0
        %1188 = vmatpush1.msra.mxu0 0.0
        %1189 = vmatprep.subr.mxu0 0.0
        %1190 = vmatpush1.msra.mxu0 0.0
        %1191 = vmatprep.subr.mxu0 0.0
        %1192 = vmatpush1.msra.mxu0 0.0
        %1193 = vmatprep.subr.mxu0 0.0
        %1194 = vmatpush1.msra.mxu0 0.0
        %1195 = vmatprep.subr.mxu0 0.0
        %1196 = vmatpush1.msra.mxu0 0.0
        %1197 = vmatprep.subr.mxu0 0.0
        %1198 = vmatpush1.msra.mxu0 0.0
        %1199 = vmatprep.subr.mxu0 0.0
        %1200 = vmatpush1.msra.mxu0 0.0
        %1201 = vmatprep.subr.mxu0 0.0
        %1202 = vmatpush1.msra.mxu0 0.0
        %1203 = vmatprep.subr.mxu0 0.0
        %1204 = vmatpush1.msra.mxu0 0.0
        %1205 = vmatprep.subr.mxu0 0.0
        %1206 = vmatpush1.msra.mxu0 0.0
        %1207 = vmatprep.subr.mxu0 0.0
        %1208 = vmatpush1.msra.mxu0 0.0
        %1209 = vmatprep.subr.mxu0 0.0
        %1210 = vmatpush1.msra.mxu0 0.0
        %1211 = vmatprep.subr.mxu0 0.0
        %1212 = vmatpush1.msra.mxu0 0.0
        %1213 = vmatprep.subr.mxu0 0.0
        %1214 = vmatpush1.msra.mxu0 0.0
        %1215 = vmatprep.subr.mxu0 0.0
        %1216 = vmatpush1.msra.mxu0 0.0
        %1217 = vmatprep.subr.mxu0 0.0
        %1218 = vmatpush1.msra.mxu0 0.0
        %1219 = vmatprep.mubr.f32.mxu0 0.0
        %v1220 = vand.u32 %v378, 4294901760
        %v1221 = vsub.f32 %v378, %v1220
        %1222 = vmatmul.mubr.f32.gmra.mrb[0].mxu0 %v1221
        %v1223 = vpop.f32.mrb[0].mxu0
        %v1224 = vadd.f32 %v956, %v1223
        %v1225 = vpop.f32.mrb[0].mxu0
        %1226 = vmatprep.mubr.f32.mxu0 0.0
        %v1227 = vand.u32 %v381, 4294901760
        %v1228 = vsub.f32 %v381, %v1227
        %1229 = vmatmul.mubr.f32.gmra.mrb[0].mxu0 %v1228
        %v1230 = vpop.f32.mrb[0].mxu0
        %v1231 = vadd.f32 %v962, %v1230
        %v1232 = vpop.f32.mrb[0].mxu0
        %1233 = vmatprep.mubr.f32.mxu0 0.0
        %v1234 = vand.u32 %v384, 4294901760
        %v1235 = vsub.f32 %v384, %v1234
        %1236 = vmatmul.mubr.f32.gmra.mrb[0].mxu0 %v1235
        %v1237 = vpop.f32.mrb[0].mxu0
        %v1238 = vadd.f32 %v968, %v1237
        %v1239 = vpop.f32.mrb[0].mxu0
        %1240 = vmatprep.mubr.f32.mxu0 0.0
        %v1241 = vand.u32 %v387, 4294901760
        %v1242 = vsub.f32 %v387, %v1241
        %1243 = vmatmul.mubr.f32.gmra.mrb[0].mxu0 %v1242
        %v1244 = vpop.f32.mrb[0].mxu0
        %v1245 = vadd.f32 %v974, %v1244
        %v1246 = vpop.f32.mrb[0].mxu0
        %1247 = vmatprep.mubr.f32.mxu0 0.0
        %v1248 = vand.u32 %v390, 4294901760
        %v1249 = vsub.f32 %v390, %v1248
        %1250 = vmatmul.mubr.f32.gmra.mrb[0].mxu0 %v1249
        %v1251 = vpop.f32.mrb[0].mxu0
        %v1252 = vadd.f32 %v980, %v1251
        %v1253 = vpop.f32.mrb[0].mxu0
        %1254 = vmatprep.mubr.f32.mxu0 0.0
        %v1255 = vand.u32 %v393, 4294901760
        %v1256 = vsub.f32 %v393, %v1255
        %1257 = vmatmul.mubr.f32.gmra.mrb[0].mxu0 %v1256
        %v1258 = vpop.f32.mrb[0].mxu0
        %v1259 = vadd.f32 %v986, %v1258
        %v1260 = vpop.f32.mrb[0].mxu0
        %1261 = vmatprep.mubr.f32.mxu0 0.0
        %v1262 = vand.u32 %v396, 4294901760
        %v1263 = vsub.f32 %v396, %v1262
        %1264 = vmatmul.mubr.f32.gmra.mrb[0].mxu0 %v1263
        %v1265 = vpop.f32.mrb[0].mxu0
        %v1266 = vadd.f32 %v992, %v1265
        %v1267 = vpop.f32.mrb[0].mxu0
        %1268 = vmatprep.mubr.f32.mxu0 0.0
        %v1269 = vand.u32 %v399, 4294901760
        %v1270 = vsub.f32 %v399, %v1269
        %1271 = vmatmul.mubr.f32.gmra.mrb[0].mxu0 %v1270
        %v1272 = vpop.f32.mrb[0].mxu0
        %v1273 = vadd.f32 %v998, %v1272
        %v1274 = vpop.f32.mrb[0].mxu0
        %1275 = vmatprep.mubr.f32.mxu0 0.0
        %v1276 = vand.u32 %v402, 4294901760
        %v1277 = vsub.f32 %v402, %v1276
        %1278 = vmatmul.mubr.f32.gmra.mrb[0].mxu0 %v1277
        %v1279 = vpop.f32.mrb[0].mxu0
        %v1280 = vadd.f32 %v1004, %v1279
        %v1281 = vpop.f32.mrb[0].mxu0
        %1282 = vmatprep.mubr.f32.mxu0 0.0
        %v1283 = vand.u32 %v405, 4294901760
        %v1284 = vsub.f32 %v405, %v1283
        %1285 = vmatmul.mubr.f32.gmra.mrb[0].mxu0 %v1284
        %v1286 = vpop.f32.mrb[0].mxu0
        %v1287 = vadd.f32 %v1010, %v1286
        %v1288 = vpop.f32.mrb[0].mxu0
        %1289 = vmatprep.mubr.f32.mxu0 0.0
        %v1290 = vand.u32 %v408, 4294901760
        %v1291 = vsub.f32 %v408, %v1290
        %1292 = vmatmul.mubr.f32.gmra.mrb[0].mxu0 %v1291
        %v1293 = vpop.f32.mrb[0].mxu0
        %v1294 = vadd.f32 %v1016, %v1293
        %v1295 = vpop.f32.mrb[0].mxu0
        %1296 = vmatprep.mubr.f32.mxu0 0.0
        %v1297 = vand.u32 %v411, 4294901760
        %v1298 = vsub.f32 %v411, %v1297
        %1299 = vmatmul.mubr.f32.gmra.mrb[0].mxu0 %v1298
        %v1300 = vpop.f32.mrb[0].mxu0
        %v1301 = vadd.f32 %v1022, %v1300
        %v1302 = vpop.f32.mrb[0].mxu0
        %1303 = vmatprep.mubr.f32.mxu0 0.0
        %v1304 = vand.u32 %v414, 4294901760
        %v1305 = vsub.f32 %v414, %v1304
        %1306 = vmatmul.mubr.f32.gmra.mrb[0].mxu0 %v1305
        %v1307 = vpop.f32.mrb[0].mxu0
        %v1308 = vadd.f32 %v1028, %v1307
        %v1309 = vpop.f32.mrb[0].mxu0
        %1310 = vmatprep.mubr.f32.mxu0 0.0
        %v1311 = vand.u32 %v417, 4294901760
        %v1312 = vsub.f32 %v417, %v1311
        %1313 = vmatmul.mubr.f32.gmra.mrb[0].mxu0 %v1312
        %v1314 = vpop.f32.mrb[0].mxu0
        %v1315 = vadd.f32 %v1034, %v1314
        %v1316 = vpop.f32.mrb[0].mxu0
        %1317 = vmatprep.mubr.f32.mxu0 0.0
        %v1318 = vand.u32 %v420, 4294901760
        %v1319 = vsub.f32 %v420, %v1318
        %1320 = vmatmul.mubr.f32.gmra.mrb[0].mxu0 %v1319
        %v1321 = vpop.f32.mrb[0].mxu0
        %v1322 = vadd.f32 %v1040, %v1321
        %v1323 = vpop.f32.mrb[0].mxu0
        %1324 = vmatprep.mubr.f32.mxu0 0.0
        %v1325 = vand.u32 %v423, 4294901760
        %v1326 = vsub.f32 %v423, %v1325
        %1327 = vmatmul.mubr.f32.gmra.mrb[0].mxu0 %v1326
        %v1328 = vpop.f32.mrb[0].mxu0
        %v1329 = vadd.f32 %v1046, %v1328
        %v1330 = vpop.f32.mrb[0].mxu0
        %1331 = vmatprep.mubr.f32.mxu0 0.0
        %v1332 = vand.u32 %v426, 4294901760
        %v1333 = vsub.f32 %v426, %v1332
        %1334 = vmatmul.mubr.f32.gmra.mrb[0].mxu0 %v1333
        %v1335 = vpop.f32.mrb[0].mxu0
        %v1336 = vadd.f32 %v1052, %v1335
        %v1337 = vpop.f32.mrb[0].mxu0
        %1338 = vmatprep.mubr.f32.mxu0 0.0
        %v1339 = vand.u32 %v429, 4294901760
        %v1340 = vsub.f32 %v429, %v1339
        %1341 = vmatmul.mubr.f32.gmra.mrb[0].mxu0 %v1340
        %v1342 = vpop.f32.mrb[0].mxu0
        %v1343 = vadd.f32 %v1058, %v1342
        %v1344 = vpop.f32.mrb[0].mxu0
        %1345 = vmatprep.mubr.f32.mxu0 0.0
        %v1346 = vand.u32 %v432, 4294901760
        %v1347 = vsub.f32 %v432, %v1346
        %1348 = vmatmul.mubr.f32.gmra.mrb[0].mxu0 %v1347
        %v1349 = vpop.f32.mrb[0].mxu0
        %v1350 = vadd.f32 %v1064, %v1349
        %v1351 = vpop.f32.mrb[0].mxu0
        %1352 = vmatprep.mubr.f32.mxu0 0.0
        %v1353 = vand.u32 %v435, 4294901760
        %v1354 = vsub.f32 %v435, %v1353
        %1355 = vmatmul.mubr.f32.gmra.mrb[0].mxu0 %v1354
        %v1356 = vpop.f32.mrb[0].mxu0
        %v1357 = vadd.f32 %v1070, %v1356
        %v1358 = vpop.f32.mrb[0].mxu0
        %1359 = vmatprep.mubr.f32.mxu0 0.0
        %v1360 = vand.u32 %v438, 4294901760
        %v1361 = vsub.f32 %v438, %v1360
        %1362 = vmatmul.mubr.f32.gmra.mrb[0].mxu0 %v1361
        %v1363 = vpop.f32.mrb[0].mxu0
        %v1364 = vadd.f32 %v1076, %v1363
        %v1365 = vpop.f32.mrb[0].mxu0
        %1366 = vmatprep.mubr.f32.mxu0 0.0
        %v1367 = vand.u32 %v441, 4294901760
        %v1368 = vsub.f32 %v441, %v1367
        %1369 = vmatmul.mubr.f32.gmra.mrb[0].mxu0 %v1368
        %v1370 = vpop.f32.mrb[0].mxu0
        %v1371 = vadd.f32 %v1082, %v1370
        %v1372 = vpop.f32.mrb[0].mxu0
        %1373 = vmatprep.mubr.f32.mxu0 0.0
        %v1374 = vand.u32 %v444, 4294901760
        %v1375 = vsub.f32 %v444, %v1374
        %1376 = vmatmul.mubr.f32.gmra.mrb[0].mxu0 %v1375
        %v1377 = vpop.f32.mrb[0].mxu0
        %v1378 = vadd.f32 %v1088, %v1377
        %v1379 = vpop.f32.mrb[0].mxu0
        %1380 = vmatprep.mubr.f32.mxu0 0.0
        %v1381 = vand.u32 %v447, 4294901760
        %v1382 = vsub.f32 %v447, %v1381
        %1383 = vmatmul.mubr.f32.gmra.mrb[0].mxu0 %v1382
        %v1384 = vpop.f32.mrb[0].mxu0
        %v1385 = vadd.f32 %v1094, %v1384
        %v1386 = vpop.f32.mrb[0].mxu0
        %1387 = vmatprep.mubr.f32.mxu0 0.0
        %v1388 = vand.u32 %v450, 4294901760
        %v1389 = vsub.f32 %v450, %v1388
        %1390 = vmatmul.mubr.f32.gmra.mrb[0].mxu0 %v1389
        %v1391 = vpop.f32.mrb[0].mxu0
        %v1392 = vadd.f32 %v1100, %v1391
        %v1393 = vpop.f32.mrb[0].mxu0
        %1394 = vmatprep.mubr.f32.mxu0 0.0
        %v1395 = vand.u32 %v453, 4294901760
        %v1396 = vsub.f32 %v453, %v1395
        %1397 = vmatmul.mubr.f32.gmra.mrb[0].mxu0 %v1396
        %v1398 = vpop.f32.mrb[0].mxu0
        %v1399 = vadd.f32 %v1106, %v1398
        %v1400 = vpop.f32.mrb[0].mxu0
        %1401 = vmatprep.mubr.f32.mxu0 0.0
        %v1402 = vand.u32 %v456, 4294901760
        %v1403 = vsub.f32 %v456, %v1402
        %1404 = vmatmul.mubr.f32.gmra.mrb[0].mxu0 %v1403
        %v1405 = vpop.f32.mrb[0].mxu0
        %v1406 = vadd.f32 %v1112, %v1405
        %v1407 = vpop.f32.mrb[0].mxu0
        %1408 = vmatprep.mubr.f32.mxu0 0.0
        %v1409 = vand.u32 %v459, 4294901760
        %v1410 = vsub.f32 %v459, %v1409
        %1411 = vmatmul.mubr.f32.gmra.mrb[0].mxu0 %v1410
        %v1412 = vpop.f32.mrb[0].mxu0
        %v1413 = vadd.f32 %v1118, %v1412
        %v1414 = vpop.f32.mrb[0].mxu0
        %1415 = vmatprep.mubr.f32.mxu0 0.0
        %v1416 = vand.u32 %v462, 4294901760
        %v1417 = vsub.f32 %v462, %v1416
        %1418 = vmatmul.mubr.f32.gmra.mrb[0].mxu0 %v1417
        %v1419 = vpop.f32.mrb[0].mxu0
        %v1420 = vadd.f32 %v1124, %v1419
        %v1421 = vpop.f32.mrb[0].mxu0
        %1422 = vmatprep.mubr.f32.mxu0 0.0
        %v1423 = vand.u32 %v465, 4294901760
        %v1424 = vsub.f32 %v465, %v1423
        %1425 = vmatmul.mubr.f32.gmra.mrb[0].mxu0 %v1424
        %v1426 = vpop.f32.mrb[0].mxu0
        %v1427 = vadd.f32 %v1130, %v1426
        %v1428 = vpop.f32.mrb[0].mxu0
        %1429 = vmatprep.mubr.f32.mxu0 0.0
        %v1430 = vand.u32 %v468, 4294901760
        %v1431 = vsub.f32 %v468, %v1430
        %1432 = vmatmul.mubr.f32.gmra.mrb[0].mxu0 %v1431
        %v1433 = vpop.f32.mrb[0].mxu0
        %v1434 = vadd.f32 %v1136, %v1433
        %v1435 = vpop.f32.mrb[0].mxu0
        %1436 = vmatprep.mubr.f32.mxu0 0.0
        %v1437 = vand.u32 %v471, 4294901760
        %v1438 = vsub.f32 %v471, %v1437
        %1439 = vmatmul.mubr.f32.gmra.mrb[0].mxu0 %v1438
        %v1440 = vpop.f32.mrb[0].mxu0
        %v1441 = vadd.f32 %v1142, %v1440
        %v1442 = vpop.f32.mrb[0].mxu0
        %1443 = vdwg.mxu0
        %1444 = vmatprep.subr.mxu0 0.0
        %v1445 = vand.u32 %v307, 4294901760
        %1446 = vmatpush1.msra.mxu0 %v1445
        %1447 = vmatprep.subr.mxu0 0.0
        %v1448 = vand.u32 %v308, 4294901760
        %1449 = vmatpush1.msra.mxu0 %v1448
        %1450 = vmatprep.subr.mxu0 0.0
        %v1451 = vand.u32 %v309, 4294901760
        %1452 = vmatpush1.msra.mxu0 %v1451
        %1453 = vmatprep.subr.mxu0 0.0
        %v1454 = vand.u32 %v310, 4294901760
        %1455 = vmatpush1.msra.mxu0 %v1454
        %1456 = vmatprep.subr.mxu0 0.0
        %v1457 = vand.u32 %v311, 4294901760
        %1458 = vmatpush1.msra.mxu0 %v1457
        %1459 = vmatprep.subr.mxu0 0.0
        %1460 = vmatpush1.msra.mxu0 0.0
        %1461 = vmatprep.subr.mxu0 0.0
        %1462 = vmatpush1.msra.mxu0 0.0
        %1463 = vmatprep.subr.mxu0 0.0
        %1464 = vmatpush1.msra.mxu0 0.0
        %1465 = vmatprep.subr.mxu0 0.0
        %1466 = vmatpush1.msra.mxu0 0.0
        %1467 = vmatprep.subr.mxu0 0.0
        %1468 = vmatpush1.msra.mxu0 0.0
        %1469 = vmatprep.subr.mxu0 0.0
        %1470 = vmatpush1.msra.mxu0 0.0
        %1471 = vmatprep.subr.mxu0 0.0
        %1472 = vmatpush1.msra.mxu0 0.0
        %1473 = vmatprep.subr.mxu0 0.0
        %1474 = vmatpush1.msra.mxu0 0.0
        %1475 = vmatprep.subr.mxu0 0.0
        %1476 = vmatpush1.msra.mxu0 0.0
        %1477 = vmatprep.subr.mxu0 0.0
        %1478 = vmatpush1.msra.mxu0 0.0
        %1479 = vmatprep.subr.mxu0 0.0
        %1480 = vmatpush1.msra.mxu0 0.0
        %1481 = vmatprep.subr.mxu0 0.0
        %1482 = vmatpush1.msra.mxu0 0.0
        %1483 = vmatprep.subr.mxu0 0.0
        %1484 = vmatpush1.msra.mxu0 0.0
        %1485 = vmatprep.subr.mxu0 0.0
        %1486 = vmatpush1.msra.mxu0 0.0
        %1487 = vmatprep.subr.mxu0 0.0
        %1488 = vmatpush1.msra.mxu0 0.0
        %1489 = vmatprep.subr.mxu0 0.0
        %1490 = vmatpush1.msra.mxu0 0.0
        %1491 = vmatprep.subr.mxu0 0.0
        %1492 = vmatpush1.msra.mxu0 0.0
        %1493 = vmatprep.subr.mxu0 0.0
        %1494 = vmatpush1.msra.mxu0 0.0
        %1495 = vmatprep.subr.mxu0 0.0
        %1496 = vmatpush1.msra.mxu0 0.0
        %1497 = vmatprep.subr.mxu0 0.0
        %1498 = vmatpush1.msra.mxu0 0.0
        %1499 = vmatprep.subr.mxu0 0.0
        %1500 = vmatpush1.msra.mxu0 0.0
        %1501 = vmatprep.subr.mxu0 0.0
        %1502 = vmatpush1.msra.mxu0 0.0
        %1503 = vmatprep.subr.mxu0 0.0
        %1504 = vmatpush1.msra.mxu0 0.0
        %1505 = vmatprep.subr.mxu0 0.0
        %1506 = vmatpush1.msra.mxu0 0.0
        %1507 = vmatprep.subr.mxu0 0.0
        %1508 = vmatpush1.msra.mxu0 0.0
        %1509 = vmatprep.subr.mxu0 0.0
        %1510 = vmatpush1.msra.mxu0 0.0
        %1511 = vmatprep.subr.mxu0 0.0
        %1512 = vmatpush1.msra.mxu0 0.0
        %1513 = vmatprep.mubr.f32.mxu0 0.0
        %v1514 = vand.u32 %v378, 4294901760
        %v1515 = vsub.f32 %v378, %v1514
        %v1516 = vand.u32 %v1515, 4294901760
        %1517 = vmatmul.mubr.f32.gmra.mrb[0].mxu0 %v1516
        %v1518 = vpop.f32.mrb[0].mxu0
        %v1519 = vadd.f32 %v1224, %v1518
        %v1520 = vpop.f32.mrb[0].mxu0
        %1521 = vmatprep.mubr.f32.mxu0 0.0
        %v1522 = vand.u32 %v381, 4294901760
        %v1523 = vsub.f32 %v381, %v1522
        %v1524 = vand.u32 %v1523, 4294901760
        %1525 = vmatmul.mubr.f32.gmra.mrb[0].mxu0 %v1524
        %v1526 = vpop.f32.mrb[0].mxu0
        %v1527 = vadd.f32 %v1231, %v1526
        %v1528 = vpop.f32.mrb[0].mxu0
        %1529 = vmatprep.mubr.f32.mxu0 0.0
        %v1530 = vand.u32 %v384, 4294901760
        %v1531 = vsub.f32 %v384, %v1530
        %v1532 = vand.u32 %v1531, 4294901760
        %1533 = vmatmul.mubr.f32.gmra.mrb[0].mxu0 %v1532
        %v1534 = vpop.f32.mrb[0].mxu0
        %v1535 = vadd.f32 %v1238, %v1534
        %v1536 = vpop.f32.mrb[0].mxu0
        %1537 = vmatprep.mubr.f32.mxu0 0.0
        %v1538 = vand.u32 %v387, 4294901760
        %v1539 = vsub.f32 %v387, %v1538
        %v1540 = vand.u32 %v1539, 4294901760
        %1541 = vmatmul.mubr.f32.gmra.mrb[0].mxu0 %v1540
        %v1542 = vpop.f32.mrb[0].mxu0
        %v1543 = vadd.f32 %v1245, %v1542
        %v1544 = vpop.f32.mrb[0].mxu0
        %1545 = vmatprep.mubr.f32.mxu0 0.0
        %v1546 = vand.u32 %v390, 4294901760
        %v1547 = vsub.f32 %v390, %v1546
        %v1548 = vand.u32 %v1547, 4294901760
        %1549 = vmatmul.mubr.f32.gmra.mrb[0].mxu0 %v1548
        %v1550 = vpop.f32.mrb[0].mxu0
        %v1551 = vadd.f32 %v1252, %v1550
        %v1552 = vpop.f32.mrb[0].mxu0
        %1553 = vmatprep.mubr.f32.mxu0 0.0
        %v1554 = vand.u32 %v393, 4294901760
        %v1555 = vsub.f32 %v393, %v1554
        %v1556 = vand.u32 %v1555, 4294901760
        %1557 = vmatmul.mubr.f32.gmra.mrb[0].mxu0 %v1556
        %v1558 = vpop.f32.mrb[0].mxu0
        %v1559 = vadd.f32 %v1259, %v1558
        %v1560 = vpop.f32.mrb[0].mxu0
        %1561 = vmatprep.mubr.f32.mxu0 0.0
        %v1562 = vand.u32 %v396, 4294901760
        %v1563 = vsub.f32 %v396, %v1562
        %v1564 = vand.u32 %v1563, 4294901760
        %1565 = vmatmul.mubr.f32.gmra.mrb[0].mxu0 %v1564
        %v1566 = vpop.f32.mrb[0].mxu0
        %v1567 = vadd.f32 %v1266, %v1566
        %v1568 = vpop.f32.mrb[0].mxu0
        %1569 = vmatprep.mubr.f32.mxu0 0.0
        %v1570 = vand.u32 %v399, 4294901760
        %v1571 = vsub.f32 %v399, %v1570
        %v1572 = vand.u32 %v1571, 4294901760
        %1573 = vmatmul.mubr.f32.gmra.mrb[0].mxu0 %v1572
        %v1574 = vpop.f32.mrb[0].mxu0
        %v1575 = vadd.f32 %v1273, %v1574
        %v1576 = vpop.f32.mrb[0].mxu0
        %1577 = vmatprep.mubr.f32.mxu0 0.0
        %v1578 = vand.u32 %v402, 4294901760
        %v1579 = vsub.f32 %v402, %v1578
        %v1580 = vand.u32 %v1579, 4294901760
        %1581 = vmatmul.mubr.f32.gmra.mrb[0].mxu0 %v1580
        %v1582 = vpop.f32.mrb[0].mxu0
        %v1583 = vadd.f32 %v1280, %v1582
        %v1584 = vpop.f32.mrb[0].mxu0
        %1585 = vmatprep.mubr.f32.mxu0 0.0
        %v1586 = vand.u32 %v405, 4294901760
        %v1587 = vsub.f32 %v405, %v1586
        %v1588 = vand.u32 %v1587, 4294901760
        %1589 = vmatmul.mubr.f32.gmra.mrb[0].mxu0 %v1588
        %v1590 = vpop.f32.mrb[0].mxu0
        %v1591 = vadd.f32 %v1287, %v1590
        %v1592 = vpop.f32.mrb[0].mxu0
        %1593 = vmatprep.mubr.f32.mxu0 0.0
        %v1594 = vand.u32 %v408, 4294901760
        %v1595 = vsub.f32 %v408, %v1594
        %v1596 = vand.u32 %v1595, 4294901760
        %1597 = vmatmul.mubr.f32.gmra.mrb[0].mxu0 %v1596
        %v1598 = vpop.f32.mrb[0].mxu0
        %v1599 = vadd.f32 %v1294, %v1598
        %v1600 = vpop.f32.mrb[0].mxu0
        %1601 = vmatprep.mubr.f32.mxu0 0.0
        %v1602 = vand.u32 %v411, 4294901760
        %v1603 = vsub.f32 %v411, %v1602
        %v1604 = vand.u32 %v1603, 4294901760
        %1605 = vmatmul.mubr.f32.gmra.mrb[0].mxu0 %v1604
        %v1606 = vpop.f32.mrb[0].mxu0
        %v1607 = vadd.f32 %v1301, %v1606
        %v1608 = vpop.f32.mrb[0].mxu0
        %1609 = vmatprep.mubr.f32.mxu0 0.0
        %v1610 = vand.u32 %v414, 4294901760
        %v1611 = vsub.f32 %v414, %v1610
        %v1612 = vand.u32 %v1611, 4294901760
        %1613 = vmatmul.mubr.f32.gmra.mrb[0].mxu0 %v1612
        %v1614 = vpop.f32.mrb[0].mxu0
        %v1615 = vadd.f32 %v1308, %v1614
        %v1616 = vpop.f32.mrb[0].mxu0
        %1617 = vmatprep.mubr.f32.mxu0 0.0
        %v1618 = vand.u32 %v417, 4294901760
        %v1619 = vsub.f32 %v417, %v1618
        %v1620 = vand.u32 %v1619, 4294901760
        %1621 = vmatmul.mubr.f32.gmra.mrb[0].mxu0 %v1620
        %v1622 = vpop.f32.mrb[0].mxu0
        %v1623 = vadd.f32 %v1315, %v1622
        %v1624 = vpop.f32.mrb[0].mxu0
        %1625 = vmatprep.mubr.f32.mxu0 0.0
        %v1626 = vand.u32 %v420, 4294901760
        %v1627 = vsub.f32 %v420, %v1626
        %v1628 = vand.u32 %v1627, 4294901760
        %1629 = vmatmul.mubr.f32.gmra.mrb[0].mxu0 %v1628
        %v1630 = vpop.f32.mrb[0].mxu0
        %v1631 = vadd.f32 %v1322, %v1630
        %v1632 = vpop.f32.mrb[0].mxu0
        %1633 = vmatprep.mubr.f32.mxu0 0.0
        %v1634 = vand.u32 %v423, 4294901760
        %v1635 = vsub.f32 %v423, %v1634
        %v1636 = vand.u32 %v1635, 4294901760
        %1637 = vmatmul.mubr.f32.gmra.mrb[0].mxu0 %v1636
        %v1638 = vpop.f32.mrb[0].mxu0
        %v1639 = vadd.f32 %v1329, %v1638
        %v1640 = vpop.f32.mrb[0].mxu0
        %1641 = vmatprep.mubr.f32.mxu0 0.0
        %v1642 = vand.u32 %v426, 4294901760
        %v1643 = vsub.f32 %v426, %v1642
        %v1644 = vand.u32 %v1643, 4294901760
        %1645 = vmatmul.mubr.f32.gmra.mrb[0].mxu0 %v1644
        %v1646 = vpop.f32.mrb[0].mxu0
        %v1647 = vadd.f32 %v1336, %v1646
        %v1648 = vpop.f32.mrb[0].mxu0
        %1649 = vmatprep.mubr.f32.mxu0 0.0
        %v1650 = vand.u32 %v429, 4294901760
        %v1651 = vsub.f32 %v429, %v1650
        %v1652 = vand.u32 %v1651, 4294901760
        %1653 = vmatmul.mubr.f32.gmra.mrb[0].mxu0 %v1652
        %v1654 = vpop.f32.mrb[0].mxu0
        %v1655 = vadd.f32 %v1343, %v1654
        %v1656 = vpop.f32.mrb[0].mxu0
        %1657 = vmatprep.mubr.f32.mxu0 0.0
        %v1658 = vand.u32 %v432, 4294901760
        %v1659 = vsub.f32 %v432, %v1658
        %v1660 = vand.u32 %v1659, 4294901760
        %1661 = vmatmul.mubr.f32.gmra.mrb[0].mxu0 %v1660
        %v1662 = vpop.f32.mrb[0].mxu0
        %v1663 = vadd.f32 %v1350, %v1662
        %v1664 = vpop.f32.mrb[0].mxu0
        %1665 = vmatprep.mubr.f32.mxu0 0.0
        %v1666 = vand.u32 %v435, 4294901760
        %v1667 = vsub.f32 %v435, %v1666
        %v1668 = vand.u32 %v1667, 4294901760
        %1669 = vmatmul.mubr.f32.gmra.mrb[0].mxu0 %v1668
        %v1670 = vpop.f32.mrb[0].mxu0
        %v1671 = vadd.f32 %v1357, %v1670
        %v1672 = vpop.f32.mrb[0].mxu0
        %1673 = vmatprep.mubr.f32.mxu0 0.0
        %v1674 = vand.u32 %v438, 4294901760
        %v1675 = vsub.f32 %v438, %v1674
        %v1676 = vand.u32 %v1675, 4294901760
        %1677 = vmatmul.mubr.f32.gmra.mrb[0].mxu0 %v1676
        %v1678 = vpop.f32.mrb[0].mxu0
        %v1679 = vadd.f32 %v1364, %v1678
        %v1680 = vpop.f32.mrb[0].mxu0
        %1681 = vmatprep.mubr.f32.mxu0 0.0
        %v1682 = vand.u32 %v441, 4294901760
        %v1683 = vsub.f32 %v441, %v1682
        %v1684 = vand.u32 %v1683, 4294901760
        %1685 = vmatmul.mubr.f32.gmra.mrb[0].mxu0 %v1684
        %v1686 = vpop.f32.mrb[0].mxu0
        %v1687 = vadd.f32 %v1371, %v1686
        %v1688 = vpop.f32.mrb[0].mxu0
        %1689 = vmatprep.mubr.f32.mxu0 0.0
        %v1690 = vand.u32 %v444, 4294901760
        %v1691 = vsub.f32 %v444, %v1690
        %v1692 = vand.u32 %v1691, 4294901760
        %1693 = vmatmul.mubr.f32.gmra.mrb[0].mxu0 %v1692
        %v1694 = vpop.f32.mrb[0].mxu0
        %v1695 = vadd.f32 %v1378, %v1694
        %v1696 = vpop.f32.mrb[0].mxu0
        %1697 = vmatprep.mubr.f32.mxu0 0.0
        %v1698 = vand.u32 %v447, 4294901760
        %v1699 = vsub.f32 %v447, %v1698
        %v1700 = vand.u32 %v1699, 4294901760
        %1701 = vmatmul.mubr.f32.gmra.mrb[0].mxu0 %v1700
        %v1702 = vpop.f32.mrb[0].mxu0
        %v1703 = vadd.f32 %v1385, %v1702
        %v1704 = vpop.f32.mrb[0].mxu0
        %1705 = vmatprep.mubr.f32.mxu0 0.0
        %v1706 = vand.u32 %v450, 4294901760
        %v1707 = vsub.f32 %v450, %v1706
        %v1708 = vand.u32 %v1707, 4294901760
        %1709 = vmatmul.mubr.f32.gmra.mrb[0].mxu0 %v1708
        %v1710 = vpop.f32.mrb[0].mxu0
        %v1711 = vadd.f32 %v1392, %v1710
        %v1712 = vpop.f32.mrb[0].mxu0
        %1713 = vmatprep.mubr.f32.mxu0 0.0
        %v1714 = vand.u32 %v453, 4294901760
        %v1715 = vsub.f32 %v453, %v1714
        %v1716 = vand.u32 %v1715, 4294901760
        %1717 = vmatmul.mubr.f32.gmra.mrb[0].mxu0 %v1716
        %v1718 = vpop.f32.mrb[0].mxu0
        %v1719 = vadd.f32 %v1399, %v1718
        %v1720 = vpop.f32.mrb[0].mxu0
        %1721 = vmatprep.mubr.f32.mxu0 0.0
        %v1722 = vand.u32 %v456, 4294901760
        %v1723 = vsub.f32 %v456, %v1722
        %v1724 = vand.u32 %v1723, 4294901760
        %1725 = vmatmul.mubr.f32.gmra.mrb[0].mxu0 %v1724
        %v1726 = vpop.f32.mrb[0].mxu0
        %v1727 = vadd.f32 %v1406, %v1726
        %v1728 = vpop.f32.mrb[0].mxu0
        %1729 = vmatprep.mubr.f32.mxu0 0.0
        %v1730 = vand.u32 %v459, 4294901760
        %v1731 = vsub.f32 %v459, %v1730
        %v1732 = vand.u32 %v1731, 4294901760
        %1733 = vmatmul.mubr.f32.gmra.mrb[0].mxu0 %v1732
        %v1734 = vpop.f32.mrb[0].mxu0
        %v1735 = vadd.f32 %v1413, %v1734
        %v1736 = vpop.f32.mrb[0].mxu0
        %1737 = vmatprep.mubr.f32.mxu0 0.0
        %v1738 = vand.u32 %v462, 4294901760
        %v1739 = vsub.f32 %v462, %v1738
        %v1740 = vand.u32 %v1739, 4294901760
        %1741 = vmatmul.mubr.f32.gmra.mrb[0].mxu0 %v1740
        %v1742 = vpop.f32.mrb[0].mxu0
        %v1743 = vadd.f32 %v1420, %v1742
        %v1744 = vpop.f32.mrb[0].mxu0
        %1745 = vmatprep.mubr.f32.mxu0 0.0
        %v1746 = vand.u32 %v465, 4294901760
        %v1747 = vsub.f32 %v465, %v1746
        %v1748 = vand.u32 %v1747, 4294901760
        %1749 = vmatmul.mubr.f32.gmra.mrb[0].mxu0 %v1748
        %v1750 = vpop.f32.mrb[0].mxu0
        %v1751 = vadd.f32 %v1427, %v1750
        %v1752 = vpop.f32.mrb[0].mxu0
        %1753 = vmatprep.mubr.f32.mxu0 0.0
        %v1754 = vand.u32 %v468, 4294901760
        %v1755 = vsub.f32 %v468, %v1754
        %v1756 = vand.u32 %v1755, 4294901760
        %1757 = vmatmul.mubr.f32.gmra.mrb[0].mxu0 %v1756
        %v1758 = vpop.f32.mrb[0].mxu0
        %v1759 = vadd.f32 %v1434, %v1758
        %v1760 = vpop.f32.mrb[0].mxu0
        %1761 = vmatprep.mubr.f32.mxu0 0.0
        %v1762 = vand.u32 %v471, 4294901760
        %v1763 = vsub.f32 %v471, %v1762
        %v1764 = vand.u32 %v1763, 4294901760
        %1765 = vmatmul.mubr.f32.gmra.mrb[0].mxu0 %v1764
        %v1766 = vpop.f32.mrb[0].mxu0
        %v1767 = vadd.f32 %v1441, %v1766
        %v1768 = vpop.f32.mrb[0].mxu0
        %1769 = vdwg.mxu0
        %1770 = vmatprep.subr.mxu0 0.0
        %v1771 = vand.u32 %v307, 4294901760
        %v1772 = vsub.f32 %v307, %v1771
        %v1773 = vand.u32 %v1772, 4294901760
        %1774 = vmatpush1.msra.mxu0 %v1773
        %1775 = vmatprep.subr.mxu0 0.0
        %v1776 = vand.u32 %v308, 4294901760
        %v1777 = vsub.f32 %v308, %v1776
        %v1778 = vand.u32 %v1777, 4294901760
        %1779 = vmatpush1.msra.mxu0 %v1778
        %1780 = vmatprep.subr.mxu0 0.0
        %v1781 = vand.u32 %v309, 4294901760
        %v1782 = vsub.f32 %v309, %v1781
        %v1783 = vand.u32 %v1782, 4294901760
        %1784 = vmatpush1.msra.mxu0 %v1783
        %1785 = vmatprep.subr.mxu0 0.0
        %v1786 = vand.u32 %v310, 4294901760
        %v1787 = vsub.f32 %v310, %v1786
        %v1788 = vand.u32 %v1787, 4294901760
        %1789 = vmatpush1.msra.mxu0 %v1788
        %1790 = vmatprep.subr.mxu0 0.0
        %v1791 = vand.u32 %v311, 4294901760
        %v1792 = vsub.f32 %v311, %v1791
        %v1793 = vand.u32 %v1792, 4294901760
        %1794 = vmatpush1.msra.mxu0 %v1793
        %1795 = vmatprep.subr.mxu0 0.0
        %1796 = vmatpush1.msra.mxu0 0.0
        %1797 = vmatprep.subr.mxu0 0.0
        %1798 = vmatpush1.msra.mxu0 0.0
        %1799 = vmatprep.subr.mxu0 0.0
        %1800 = vmatpush1.msra.mxu0 0.0
        %1801 = vmatprep.subr.mxu0 0.0
        %1802 = vmatpush1.msra.mxu0 0.0
        %1803 = vmatprep.subr.mxu0 0.0
        %1804 = vmatpush1.msra.mxu0 0.0
        %1805 = vmatprep.subr.mxu0 0.0
        %1806 = vmatpush1.msra.mxu0 0.0
        %1807 = vmatprep.subr.mxu0 0.0
        %1808 = vmatpush1.msra.mxu0 0.0
        %1809 = vmatprep.subr.mxu0 0.0
        %1810 = vmatpush1.msra.mxu0 0.0
        %1811 = vmatprep.subr.mxu0 0.0
        %1812 = vmatpush1.msra.mxu0 0.0
        %1813 = vmatprep.subr.mxu0 0.0
        %1814 = vmatpush1.msra.mxu0 0.0
        %1815 = vmatprep.subr.mxu0 0.0
        %1816 = vmatpush1.msra.mxu0 0.0
        %1817 = vmatprep.subr.mxu0 0.0
        %1818 = vmatpush1.msra.mxu0 0.0
        %1819 = vmatprep.subr.mxu0 0.0
        %1820 = vmatpush1.msra.mxu0 0.0
        %1821 = vmatprep.subr.mxu0 0.0
        %1822 = vmatpush1.msra.mxu0 0.0
        %1823 = vmatprep.subr.mxu0 0.0
        %1824 = vmatpush1.msra.mxu0 0.0
        %1825 = vmatprep.subr.mxu0 0.0
        %1826 = vmatpush1.msra.mxu0 0.0
        %1827 = vmatprep.subr.mxu0 0.0
        %1828 = vmatpush1.msra.mxu0 0.0
        %1829 = vmatprep.subr.mxu0 0.0
        %1830 = vmatpush1.msra.mxu0 0.0
        %1831 = vmatprep.subr.mxu0 0.0
        %1832 = vmatpush1.msra.mxu0 0.0
        %1833 = vmatprep.subr.mxu0 0.0
        %1834 = vmatpush1.msra.mxu0 0.0
        %1835 = vmatprep.subr.mxu0 0.0
        %1836 = vmatpush1.msra.mxu0 0.0
        %1837 = vmatprep.subr.mxu0 0.0
        %1838 = vmatpush1.msra.mxu0 0.0
        %1839 = vmatprep.subr.mxu0 0.0
        %1840 = vmatpush1.msra.mxu0 0.0
        %1841 = vmatprep.subr.mxu0 0.0
        %1842 = vmatpush1.msra.mxu0 0.0
        %1843 = vmatprep.subr.mxu0 0.0
        %1844 = vmatpush1.msra.mxu0 0.0
        %1845 = vmatprep.subr.mxu0 0.0
        %1846 = vmatpush1.msra.mxu0 0.0
        %1847 = vmatprep.subr.mxu0 0.0
        %1848 = vmatpush1.msra.mxu0 0.0
        %1849 = vmatprep.mubr.f32.mxu0 0.0
        %v1850 = vand.u32 %v378, 4294901760
        %1851 = vmatmul.mubr.f32.gmra.mrb[0].mxu0 %v1850
        %v1852 = vpop.f32.mrb[0].mxu0
        %v1853 = vadd.f32 %v1519, %v1852
        %v1854 = vpop.f32.mrb[0].mxu0
        %1855 = vmatprep.mubr.f32.mxu0 0.0
        %v1856 = vand.u32 %v381, 4294901760
        %1857 = vmatmul.mubr.f32.gmra.mrb[0].mxu0 %v1856
        %v1858 = vpop.f32.mrb[0].mxu0
        %v1859 = vadd.f32 %v1527, %v1858
        %v1860 = vpop.f32.mrb[0].mxu0
        %1861 = vmatprep.mubr.f32.mxu0 0.0
        %v1862 = vand.u32 %v384, 4294901760
        %1863 = vmatmul.mubr.f32.gmra.mrb[0].mxu0 %v1862
        %v1864 = vpop.f32.mrb[0].mxu0
        %v1865 = vadd.f32 %v1535, %v1864
        %v1866 = vpop.f32.mrb[0].mxu0
        %1867 = vmatprep.mubr.f32.mxu0 0.0
        %v1868 = vand.u32 %v387, 4294901760
        %1869 = vmatmul.mubr.f32.gmra.mrb[0].mxu0 %v1868
        %v1870 = vpop.f32.mrb[0].mxu0
        %v1871 = vadd.f32 %v1543, %v1870
        %v1872 = vpop.f32.mrb[0].mxu0
        %1873 = vmatprep.mubr.f32.mxu0 0.0
        %v1874 = vand.u32 %v390, 4294901760
        %1875 = vmatmul.mubr.f32.gmra.mrb[0].mxu0 %v1874
        %v1876 = vpop.f32.mrb[0].mxu0
        %v1877 = vadd.f32 %v1551, %v1876
        %v1878 = vpop.f32.mrb[0].mxu0
        %1879 = vmatprep.mubr.f32.mxu0 0.0
        %v1880 = vand.u32 %v393, 4294901760
        %1881 = vmatmul.mubr.f32.gmra.mrb[0].mxu0 %v1880
        %v1882 = vpop.f32.mrb[0].mxu0
        %v1883 = vadd.f32 %v1559, %v1882
        %v1884 = vpop.f32.mrb[0].mxu0
        %1885 = vmatprep.mubr.f32.mxu0 0.0
        %v1886 = vand.u32 %v396, 4294901760
        %1887 = vmatmul.mubr.f32.gmra.mrb[0].mxu0 %v1886
        %v1888 = vpop.f32.mrb[0].mxu0
        %v1889 = vadd.f32 %v1567, %v1888
        %v1890 = vpop.f32.mrb[0].mxu0
        %1891 = vmatprep.mubr.f32.mxu0 0.0
        %v1892 = vand.u32 %v399, 4294901760
        %1893 = vmatmul.mubr.f32.gmra.mrb[0].mxu0 %v1892
        %v1894 = vpop.f32.mrb[0].mxu0
        %v1895 = vadd.f32 %v1575, %v1894
        %v1896 = vpop.f32.mrb[0].mxu0
        %1897 = vmatprep.mubr.f32.mxu0 0.0
        %v1898 = vand.u32 %v402, 4294901760
        %1899 = vmatmul.mubr.f32.gmra.mrb[0].mxu0 %v1898
        %v1900 = vpop.f32.mrb[0].mxu0
        %v1901 = vadd.f32 %v1583, %v1900
        %v1902 = vpop.f32.mrb[0].mxu0
        %1903 = vmatprep.mubr.f32.mxu0 0.0
        %v1904 = vand.u32 %v405, 4294901760
        %1905 = vmatmul.mubr.f32.gmra.mrb[0].mxu0 %v1904
        %v1906 = vpop.f32.mrb[0].mxu0
        %v1907 = vadd.f32 %v1591, %v1906
        %v1908 = vpop.f32.mrb[0].mxu0
        %1909 = vmatprep.mubr.f32.mxu0 0.0
        %v1910 = vand.u32 %v408, 4294901760
        %1911 = vmatmul.mubr.f32.gmra.mrb[0].mxu0 %v1910
        %v1912 = vpop.f32.mrb[0].mxu0
        %v1913 = vadd.f32 %v1599, %v1912
        %v1914 = vpop.f32.mrb[0].mxu0
        %1915 = vmatprep.mubr.f32.mxu0 0.0
        %v1916 = vand.u32 %v411, 4294901760
        %1917 = vmatmul.mubr.f32.gmra.mrb[0].mxu0 %v1916
        %v1918 = vpop.f32.mrb[0].mxu0
        %v1919 = vadd.f32 %v1607, %v1918
        %v1920 = vpop.f32.mrb[0].mxu0
        %1921 = vmatprep.mubr.f32.mxu0 0.0
        %v1922 = vand.u32 %v414, 4294901760
        %1923 = vmatmul.mubr.f32.gmra.mrb[0].mxu0 %v1922
        %v1924 = vpop.f32.mrb[0].mxu0
        %v1925 = vadd.f32 %v1615, %v1924
        %v1926 = vpop.f32.mrb[0].mxu0
        %1927 = vmatprep.mubr.f32.mxu0 0.0
        %v1928 = vand.u32 %v417, 4294901760
        %1929 = vmatmul.mubr.f32.gmra.mrb[0].mxu0 %v1928
        %v1930 = vpop.f32.mrb[0].mxu0
        %v1931 = vadd.f32 %v1623, %v1930
        %v1932 = vpop.f32.mrb[0].mxu0
        %1933 = vmatprep.mubr.f32.mxu0 0.0
        %v1934 = vand.u32 %v420, 4294901760
        %1935 = vmatmul.mubr.f32.gmra.mrb[0].mxu0 %v1934
        %v1936 = vpop.f32.mrb[0].mxu0
        %v1937 = vadd.f32 %v1631, %v1936
        %v1938 = vpop.f32.mrb[0].mxu0
        %1939 = vmatprep.mubr.f32.mxu0 0.0
        %v1940 = vand.u32 %v423, 4294901760
        %1941 = vmatmul.mubr.f32.gmra.mrb[0].mxu0 %v1940
        %v1942 = vpop.f32.mrb[0].mxu0
        %v1943 = vadd.f32 %v1639, %v1942
        %v1944 = vpop.f32.mrb[0].mxu0
        %1945 = vmatprep.mubr.f32.mxu0 0.0
        %v1946 = vand.u32 %v426, 4294901760
        %1947 = vmatmul.mubr.f32.gmra.mrb[0].mxu0 %v1946
        %v1948 = vpop.f32.mrb[0].mxu0
        %v1949 = vadd.f32 %v1647, %v1948
        %v1950 = vpop.f32.mrb[0].mxu0
        %1951 = vmatprep.mubr.f32.mxu0 0.0
        %v1952 = vand.u32 %v429, 4294901760
        %1953 = vmatmul.mubr.f32.gmra.mrb[0].mxu0 %v1952
        %v1954 = vpop.f32.mrb[0].mxu0
        %v1955 = vadd.f32 %v1655, %v1954
        %v1956 = vpop.f32.mrb[0].mxu0
        %1957 = vmatprep.mubr.f32.mxu0 0.0
        %v1958 = vand.u32 %v432, 4294901760
        %1959 = vmatmul.mubr.f32.gmra.mrb[0].mxu0 %v1958
        %v1960 = vpop.f32.mrb[0].mxu0
        %v1961 = vadd.f32 %v1663, %v1960
        %v1962 = vpop.f32.mrb[0].mxu0
        %1963 = vmatprep.mubr.f32.mxu0 0.0
        %v1964 = vand.u32 %v435, 4294901760
        %1965 = vmatmul.mubr.f32.gmra.mrb[0].mxu0 %v1964
        %v1966 = vpop.f32.mrb[0].mxu0
        %v1967 = vadd.f32 %v1671, %v1966
        %v1968 = vpop.f32.mrb[0].mxu0
        %1969 = vmatprep.mubr.f32.mxu0 0.0
        %v1970 = vand.u32 %v438, 4294901760
        %1971 = vmatmul.mubr.f32.gmra.mrb[0].mxu0 %v1970
        %v1972 = vpop.f32.mrb[0].mxu0
        %v1973 = vadd.f32 %v1679, %v1972
        %v1974 = vpop.f32.mrb[0].mxu0
        %1975 = vmatprep.mubr.f32.mxu0 0.0
        %v1976 = vand.u32 %v441, 4294901760
        %1977 = vmatmul.mubr.f32.gmra.mrb[0].mxu0 %v1976
        %v1978 = vpop.f32.mrb[0].mxu0
        %v1979 = vadd.f32 %v1687, %v1978
        %v1980 = vpop.f32.mrb[0].mxu0
        %1981 = vmatprep.mubr.f32.mxu0 0.0
        %v1982 = vand.u32 %v444, 4294901760
        %1983 = vmatmul.mubr.f32.gmra.mrb[0].mxu0 %v1982
        %v1984 = vpop.f32.mrb[0].mxu0
        %v1985 = vadd.f32 %v1695, %v1984
        %v1986 = vpop.f32.mrb[0].mxu0
        %1987 = vmatprep.mubr.f32.mxu0 0.0
        %v1988 = vand.u32 %v447, 4294901760
        %1989 = vmatmul.mubr.f32.gmra.mrb[0].mxu0 %v1988
        %v1990 = vpop.f32.mrb[0].mxu0
        %v1991 = vadd.f32 %v1703, %v1990
        %v1992 = vpop.f32.mrb[0].mxu0
        %1993 = vmatprep.mubr.f32.mxu0 0.0
        %v1994 = vand.u32 %v450, 4294901760
        %1995 = vmatmul.mubr.f32.gmra.mrb[0].mxu0 %v1994
        %v1996 = vpop.f32.mrb[0].mxu0
        %v1997 = vadd.f32 %v1711, %v1996
        %v1998 = vpop.f32.mrb[0].mxu0
        %1999 = vmatprep.mubr.f32.mxu0 0.0
        %v2000 = vand.u32 %v453, 4294901760
        %2001 = vmatmul.mubr.f32.gmra.mrb[0].mxu0 %v2000
        %v2002 = vpop.f32.mrb[0].mxu0
        %v2003 = vadd.f32 %v1719, %v2002
        %v2004 = vpop.f32.mrb[0].mxu0
        %2005 = vmatprep.mubr.f32.mxu0 0.0
        %v2006 = vand.u32 %v456, 4294901760
        %2007 = vmatmul.mubr.f32.gmra.mrb[0].mxu0 %v2006
        %v2008 = vpop.f32.mrb[0].mxu0
        %v2009 = vadd.f32 %v1727, %v2008
        %v2010 = vpop.f32.mrb[0].mxu0
        %2011 = vmatprep.mubr.f32.mxu0 0.0
        %v2012 = vand.u32 %v459, 4294901760
        %2013 = vmatmul.mubr.f32.gmra.mrb[0].mxu0 %v2012
        %v2014 = vpop.f32.mrb[0].mxu0
        %v2015 = vadd.f32 %v1735, %v2014
        %v2016 = vpop.f32.mrb[0].mxu0
        %2017 = vmatprep.mubr.f32.mxu0 0.0
        %v2018 = vand.u32 %v462, 4294901760
        %2019 = vmatmul.mubr.f32.gmra.mrb[0].mxu0 %v2018
        %v2020 = vpop.f32.mrb[0].mxu0
        %v2021 = vadd.f32 %v1743, %v2020
        %v2022 = vpop.f32.mrb[0].mxu0
        %2023 = vmatprep.mubr.f32.mxu0 0.0
        %v2024 = vand.u32 %v465, 4294901760
        %2025 = vmatmul.mubr.f32.gmra.mrb[0].mxu0 %v2024
        %v2026 = vpop.f32.mrb[0].mxu0
        %v2027 = vadd.f32 %v1751, %v2026
        %v2028 = vpop.f32.mrb[0].mxu0
        %2029 = vmatprep.mubr.f32.mxu0 0.0
        %v2030 = vand.u32 %v468, 4294901760
        %2031 = vmatmul.mubr.f32.gmra.mrb[0].mxu0 %v2030
        %v2032 = vpop.f32.mrb[0].mxu0
        %v2033 = vadd.f32 %v1759, %v2032
        %v2034 = vpop.f32.mrb[0].mxu0
        %2035 = vmatprep.mubr.f32.mxu0 0.0
        %v2036 = vand.u32 %v471, 4294901760
        %2037 = vmatmul.mubr.f32.gmra.mrb[0].mxu0 %v2036
        %v2038 = vpop.f32.mrb[0].mxu0
        %v2039 = vadd.f32 %v1767, %v2038
        %v2040 = vpop.f32.mrb[0].mxu0
        %2041 = vdwg.mxu0
        %2042 = vmatprep.subr.mxu0 0.0
        %v2043 = vand.u32 %v307, 4294901760
        %2044 = vmatpush1.msra.mxu0 %v2043
        %2045 = vmatprep.subr.mxu0 0.0
        %v2046 = vand.u32 %v308, 4294901760
        %2047 = vmatpush1.msra.mxu0 %v2046
        %2048 = vmatprep.subr.mxu0 0.0
        %v2049 = vand.u32 %v309, 4294901760
        %2050 = vmatpush1.msra.mxu0 %v2049
        %2051 = vmatprep.subr.mxu0 0.0
        %v2052 = vand.u32 %v310, 4294901760
        %2053 = vmatpush1.msra.mxu0 %v2052
        %2054 = vmatprep.subr.mxu0 0.0
        %v2055 = vand.u32 %v311, 4294901760
        %2056 = vmatpush1.msra.mxu0 %v2055
        %2057 = vmatprep.subr.mxu0 0.0
        %2058 = vmatpush1.msra.mxu0 0.0
        %2059 = vmatprep.subr.mxu0 0.0
        %2060 = vmatpush1.msra.mxu0 0.0
        %2061 = vmatprep.subr.mxu0 0.0
        %2062 = vmatpush1.msra.mxu0 0.0
        %2063 = vmatprep.subr.mxu0 0.0
        %2064 = vmatpush1.msra.mxu0 0.0
        %2065 = vmatprep.subr.mxu0 0.0
        %2066 = vmatpush1.msra.mxu0 0.0
        %2067 = vmatprep.subr.mxu0 0.0
        %2068 = vmatpush1.msra.mxu0 0.0
        %2069 = vmatprep.subr.mxu0 0.0
        %2070 = vmatpush1.msra.mxu0 0.0
        %2071 = vmatprep.subr.mxu0 0.0
        %2072 = vmatpush1.msra.mxu0 0.0
        %2073 = vmatprep.subr.mxu0 0.0
        %2074 = vmatpush1.msra.mxu0 0.0
        %2075 = vmatprep.subr.mxu0 0.0
        %2076 = vmatpush1.msra.mxu0 0.0
        %2077 = vmatprep.subr.mxu0 0.0
        %2078 = vmatpush1.msra.mxu0 0.0
        %2079 = vmatprep.subr.mxu0 0.0
        %2080 = vmatpush1.msra.mxu0 0.0
        %2081 = vmatprep.subr.mxu0 0.0
        %2082 = vmatpush1.msra.mxu0 0.0
        %2083 = vmatprep.subr.mxu0 0.0
        %2084 = vmatpush1.msra.mxu0 0.0
        %2085 = vmatprep.subr.mxu0 0.0
        %2086 = vmatpush1.msra.mxu0 0.0
        %2087 = vmatprep.subr.mxu0 0.0
        %2088 = vmatpush1.msra.mxu0 0.0
        %2089 = vmatprep.subr.mxu0 0.0
        %2090 = vmatpush1.msra.mxu0 0.0
        %2091 = vmatprep.subr.mxu0 0.0
        %2092 = vmatpush1.msra.mxu0 0.0
        %2093 = vmatprep.subr.mxu0 0.0
        %2094 = vmatpush1.msra.mxu0 0.0
        %2095 = vmatprep.subr.mxu0 0.0
        %2096 = vmatpush1.msra.mxu0 0.0
        %2097 = vmatprep.subr.mxu0 0.0
        %2098 = vmatpush1.msra.mxu0 0.0
        %2099 = vmatprep.subr.mxu0 0.0
        %2100 = vmatpush1.msra.mxu0 0.0
        %2101 = vmatprep.subr.mxu0 0.0
        %2102 = vmatpush1.msra.mxu0 0.0
        %2103 = vmatprep.subr.mxu0 0.0
        %2104 = vmatpush1.msra.mxu0 0.0
        %2105 = vmatprep.subr.mxu0 0.0
        %2106 = vmatpush1.msra.mxu0 0.0
        %2107 = vmatprep.subr.mxu0 0.0
        %2108 = vmatpush1.msra.mxu0 0.0
        %2109 = vmatprep.subr.mxu0 0.0
        %2110 = vmatpush1.msra.mxu0 0.0
        %2111 = vmatprep.mubr.f32.mxu0 0.0
        %v2112 = vand.u32 %v378, 4294901760
        %2113 = vmatmul.mubr.f32.gmra.mrb[0].mxu0 %v2112
        %v2114 = vpop.f32.mrb[0].mxu0
        %v2115 = vadd.f32 %v1853, %v2114
        %v2116 = vpop.f32.mrb[0].mxu0
        %2117 = vmatprep.mubr.f32.mxu0 0.0
        %v2118 = vand.u32 %v381, 4294901760
        %2119 = vmatmul.mubr.f32.gmra.mrb[0].mxu0 %v2118
        %v2120 = vpop.f32.mrb[0].mxu0
        %v2121 = vadd.f32 %v1859, %v2120
        %v2122 = vpop.f32.mrb[0].mxu0
        %2123 = vmatprep.mubr.f32.mxu0 0.0
        %v2124 = vand.u32 %v384, 4294901760
        %2125 = vmatmul.mubr.f32.gmra.mrb[0].mxu0 %v2124
        %v2126 = vpop.f32.mrb[0].mxu0
        %v2127 = vadd.f32 %v1865, %v2126
        %v2128 = vpop.f32.mrb[0].mxu0
        %2129 = vmatprep.mubr.f32.mxu0 0.0
        %v2130 = vand.u32 %v387, 4294901760
        %2131 = vmatmul.mubr.f32.gmra.mrb[0].mxu0 %v2130
        %v2132 = vpop.f32.mrb[0].mxu0
        %v2133 = vadd.f32 %v1871, %v2132
        %v2134 = vpop.f32.mrb[0].mxu0
        %2135 = vmatprep.mubr.f32.mxu0 0.0
        %v2136 = vand.u32 %v390, 4294901760
        %2137 = vmatmul.mubr.f32.gmra.mrb[0].mxu0 %v2136
        %v2138 = vpop.f32.mrb[0].mxu0
        %v2139 = vadd.f32 %v1877, %v2138
        %v2140 = vpop.f32.mrb[0].mxu0
        %2141 = vmatprep.mubr.f32.mxu0 0.0
        %v2142 = vand.u32 %v393, 4294901760
        %2143 = vmatmul.mubr.f32.gmra.mrb[0].mxu0 %v2142
        %v2144 = vpop.f32.mrb[0].mxu0
        %v2145 = vadd.f32 %v1883, %v2144
        %v2146 = vpop.f32.mrb[0].mxu0
        %2147 = vmatprep.mubr.f32.mxu0 0.0
        %v2148 = vand.u32 %v396, 4294901760
        %2149 = vmatmul.mubr.f32.gmra.mrb[0].mxu0 %v2148
        %v2150 = vpop.f32.mrb[0].mxu0
        %v2151 = vadd.f32 %v1889, %v2150
        %v2152 = vpop.f32.mrb[0].mxu0
        %2153 = vmatprep.mubr.f32.mxu0 0.0
        %v2154 = vand.u32 %v399, 4294901760
        %2155 = vmatmul.mubr.f32.gmra.mrb[0].mxu0 %v2154
        %v2156 = vpop.f32.mrb[0].mxu0
        %v2157 = vadd.f32 %v1895, %v2156
        %v2158 = vpop.f32.mrb[0].mxu0
        %2159 = vmatprep.mubr.f32.mxu0 0.0
        %v2160 = vand.u32 %v402, 4294901760
        %2161 = vmatmul.mubr.f32.gmra.mrb[0].mxu0 %v2160
        %v2162 = vpop.f32.mrb[0].mxu0
        %v2163 = vadd.f32 %v1901, %v2162
        %v2164 = vpop.f32.mrb[0].mxu0
        %2165 = vmatprep.mubr.f32.mxu0 0.0
        %v2166 = vand.u32 %v405, 4294901760
        %2167 = vmatmul.mubr.f32.gmra.mrb[0].mxu0 %v2166
        %v2168 = vpop.f32.mrb[0].mxu0
        %v2169 = vadd.f32 %v1907, %v2168
        %v2170 = vpop.f32.mrb[0].mxu0
        %2171 = vmatprep.mubr.f32.mxu0 0.0
        %v2172 = vand.u32 %v408, 4294901760
        %2173 = vmatmul.mubr.f32.gmra.mrb[0].mxu0 %v2172
        %v2174 = vpop.f32.mrb[0].mxu0
        %v2175 = vadd.f32 %v1913, %v2174
        %v2176 = vpop.f32.mrb[0].mxu0
        %2177 = vmatprep.mubr.f32.mxu0 0.0
        %v2178 = vand.u32 %v411, 4294901760
        %2179 = vmatmul.mubr.f32.gmra.mrb[0].mxu0 %v2178
        %v2180 = vpop.f32.mrb[0].mxu0
        %v2181 = vadd.f32 %v1919, %v2180
        %v2182 = vpop.f32.mrb[0].mxu0
        %2183 = vmatprep.mubr.f32.mxu0 0.0
        %v2184 = vand.u32 %v414, 4294901760
        %2185 = vmatmul.mubr.f32.gmra.mrb[0].mxu0 %v2184
        %v2186 = vpop.f32.mrb[0].mxu0
        %v2187 = vadd.f32 %v1925, %v2186
        %v2188 = vpop.f32.mrb[0].mxu0
        %2189 = vmatprep.mubr.f32.mxu0 0.0
        %v2190 = vand.u32 %v417, 4294901760
        %2191 = vmatmul.mubr.f32.gmra.mrb[0].mxu0 %v2190
        %v2192 = vpop.f32.mrb[0].mxu0
        %v2193 = vadd.f32 %v1931, %v2192
        %v2194 = vpop.f32.mrb[0].mxu0
        %2195 = vmatprep.mubr.f32.mxu0 0.0
        %v2196 = vand.u32 %v420, 4294901760
        %2197 = vmatmul.mubr.f32.gmra.mrb[0].mxu0 %v2196
        %v2198 = vpop.f32.mrb[0].mxu0
        %v2199 = vadd.f32 %v1937, %v2198
        %v2200 = vpop.f32.mrb[0].mxu0
        %2201 = vmatprep.mubr.f32.mxu0 0.0
        %v2202 = vand.u32 %v423, 4294901760
        %2203 = vmatmul.mubr.f32.gmra.mrb[0].mxu0 %v2202
        %v2204 = vpop.f32.mrb[0].mxu0
        %v2205 = vadd.f32 %v1943, %v2204
        %v2206 = vpop.f32.mrb[0].mxu0
        %2207 = vmatprep.mubr.f32.mxu0 0.0
        %v2208 = vand.u32 %v426, 4294901760
        %2209 = vmatmul.mubr.f32.gmra.mrb[0].mxu0 %v2208
        %v2210 = vpop.f32.mrb[0].mxu0
        %v2211 = vadd.f32 %v1949, %v2210
        %v2212 = vpop.f32.mrb[0].mxu0
        %2213 = vmatprep.mubr.f32.mxu0 0.0
        %v2214 = vand.u32 %v429, 4294901760
        %2215 = vmatmul.mubr.f32.gmra.mrb[0].mxu0 %v2214
        %v2216 = vpop.f32.mrb[0].mxu0
        %v2217 = vadd.f32 %v1955, %v2216
        %v2218 = vpop.f32.mrb[0].mxu0
        %2219 = vmatprep.mubr.f32.mxu0 0.0
        %v2220 = vand.u32 %v432, 4294901760
        %2221 = vmatmul.mubr.f32.gmra.mrb[0].mxu0 %v2220
        %v2222 = vpop.f32.mrb[0].mxu0
        %v2223 = vadd.f32 %v1961, %v2222
        %v2224 = vpop.f32.mrb[0].mxu0
        %2225 = vmatprep.mubr.f32.mxu0 0.0
        %v2226 = vand.u32 %v435, 4294901760
        %2227 = vmatmul.mubr.f32.gmra.mrb[0].mxu0 %v2226
        %v2228 = vpop.f32.mrb[0].mxu0
        %v2229 = vadd.f32 %v1967, %v2228
        %v2230 = vpop.f32.mrb[0].mxu0
        %2231 = vmatprep.mubr.f32.mxu0 0.0
        %v2232 = vand.u32 %v438, 4294901760
        %2233 = vmatmul.mubr.f32.gmra.mrb[0].mxu0 %v2232
        %v2234 = vpop.f32.mrb[0].mxu0
        %v2235 = vadd.f32 %v1973, %v2234
        %v2236 = vpop.f32.mrb[0].mxu0
        %2237 = vmatprep.mubr.f32.mxu0 0.0
        %v2238 = vand.u32 %v441, 4294901760
        %2239 = vmatmul.mubr.f32.gmra.mrb[0].mxu0 %v2238
        %v2240 = vpop.f32.mrb[0].mxu0
        %v2241 = vadd.f32 %v1979, %v2240
        %v2242 = vpop.f32.mrb[0].mxu0
        %2243 = vmatprep.mubr.f32.mxu0 0.0
        %v2244 = vand.u32 %v444, 4294901760
        %2245 = vmatmul.mubr.f32.gmra.mrb[0].mxu0 %v2244
        %v2246 = vpop.f32.mrb[0].mxu0
        %v2247 = vadd.f32 %v1985, %v2246
        %v2248 = vpop.f32.mrb[0].mxu0
        %2249 = vmatprep.mubr.f32.mxu0 0.0
        %v2250 = vand.u32 %v447, 4294901760
        %2251 = vmatmul.mubr.f32.gmra.mrb[0].mxu0 %v2250
        %v2252 = vpop.f32.mrb[0].mxu0
        %v2253 = vadd.f32 %v1991, %v2252
        %v2254 = vpop.f32.mrb[0].mxu0
        %2255 = vmatprep.mubr.f32.mxu0 0.0
        %v2256 = vand.u32 %v450, 4294901760
        %2257 = vmatmul.mubr.f32.gmra.mrb[0].mxu0 %v2256
        %v2258 = vpop.f32.mrb[0].mxu0
        %v2259 = vadd.f32 %v1997, %v2258
        %v2260 = vpop.f32.mrb[0].mxu0
        %2261 = vmatprep.mubr.f32.mxu0 0.0
        %v2262 = vand.u32 %v453, 4294901760
        %2263 = vmatmul.mubr.f32.gmra.mrb[0].mxu0 %v2262
        %v2264 = vpop.f32.mrb[0].mxu0
        %v2265 = vadd.f32 %v2003, %v2264
        %v2266 = vpop.f32.mrb[0].mxu0
        %2267 = vmatprep.mubr.f32.mxu0 0.0
        %v2268 = vand.u32 %v456, 4294901760
        %2269 = vmatmul.mubr.f32.gmra.mrb[0].mxu0 %v2268
        %v2270 = vpop.f32.mrb[0].mxu0
        %v2271 = vadd.f32 %v2009, %v2270
        %v2272 = vpop.f32.mrb[0].mxu0
        %2273 = vmatprep.mubr.f32.mxu0 0.0
        %v2274 = vand.u32 %v459, 4294901760
        %2275 = vmatmul.mubr.f32.gmra.mrb[0].mxu0 %v2274
        %v2276 = vpop.f32.mrb[0].mxu0
        %v2277 = vadd.f32 %v2015, %v2276
        %v2278 = vpop.f32.mrb[0].mxu0
        %2279 = vmatprep.mubr.f32.mxu0 0.0
        %v2280 = vand.u32 %v462, 4294901760
        %2281 = vmatmul.mubr.f32.gmra.mrb[0].mxu0 %v2280
        %v2282 = vpop.f32.mrb[0].mxu0
        %v2283 = vadd.f32 %v2021, %v2282
        %v2284 = vpop.f32.mrb[0].mxu0
        %2285 = vmatprep.mubr.f32.mxu0 0.0
        %v2286 = vand.u32 %v465, 4294901760
        %2287 = vmatmul.mubr.f32.gmra.mrb[0].mxu0 %v2286
        %v2288 = vpop.f32.mrb[0].mxu0
        %v2289 = vadd.f32 %v2027, %v2288
        %v2290 = vpop.f32.mrb[0].mxu0
        %2291 = vmatprep.mubr.f32.mxu0 0.0
        %v2292 = vand.u32 %v468, 4294901760
        %2293 = vmatmul.mubr.f32.gmra.mrb[0].mxu0 %v2292
        %v2294 = vpop.f32.mrb[0].mxu0
        %v2295 = vadd.f32 %v2033, %v2294
        %v2296 = vpop.f32.mrb[0].mxu0
        %2297 = vmatprep.mubr.f32.mxu0 0.0
        %v2298 = vand.u32 %v471, 4294901760
        %2299 = vmatmul.mubr.f32.gmra.mrb[0].mxu0 %v2298
        %v2300 = vpop.f32.mrb[0].mxu0
        %v2301 = vadd.f32 %v2039, %v2300
        %v2302 = vpop.f32.mrb[0].mxu0
        %2303 = vdwg.mxu0
        %v2304 = vld [vmem:[%s251] sm:$0xff]
        %v2305 = vld [vmem:[%s251 + $0x8] sm:$0xff]
        %v2306 = vld [vmem:[%s251 + $0x10] sm:$0xff]
        %v2307 = vld [vmem:[%s251 + $0x18] sm:$0xff]
        %v2308 = vld [vmem:[%s251 + $0x20] sm:$0xff]
        %v2309 = vld [vmem:[%s251 + $0x28] sm:$0xff]
        %v2310 = vld [vmem:[%s251 + $0x30] sm:$0xff]
        %v2311 = vld [vmem:[%s251 + $0x38] sm:$0xff]
        %v2312 = vld [vmem:[%s251 + $0x40] sm:$0xff]
        %v2313 = vld [vmem:[%s251 + $0x48] sm:$0xff]
        %v2314 = vld [vmem:[%s251 + $0x50] sm:$0xff]
        %v2315 = vld [vmem:[%s251 + $0x58] sm:$0xff]
        %v2316 = vld [vmem:[%s251 + $0x60] sm:$0xff]
        %v2317 = vld [vmem:[%s251 + $0x68] sm:$0xff]
        %v2318 = vld [vmem:[%s251 + $0x70] sm:$0xff]
        %v2319 = vld [vmem:[%s251 + $0x78] sm:$0xff]
        %v2320 = vld [vmem:[%s251 + $0x80] sm:$0xff]
        %v2321 = vld [vmem:[%s251 + $0x88] sm:$0xff]
        %v2322 = vld [vmem:[%s251 + $0x90] sm:$0xff]
        %v2323 = vld [vmem:[%s251 + $0x98] sm:$0xff]
        %v2324 = vld [vmem:[%s251 + $0xa0] sm:$0xff]
        %v2325 = vld [vmem:[%s251 + $0xa8] sm:$0xff]
        %v2326 = vld [vmem:[%s251 + $0xb0] sm:$0xff]
        %v2327 = vld [vmem:[%s251 + $0xb8] sm:$0xff]
        %v2328 = vld [vmem:[%s251 + $0xc0] sm:$0xff]
        %v2329 = vld [vmem:[%s251 + $0xc8] sm:$0xff]
        %v2330 = vld [vmem:[%s251 + $0xd0] sm:$0xff]
        %v2331 = vld [vmem:[%s251 + $0xd8] sm:$0xff]
        %v2332 = vld [vmem:[%s251 + $0xe0] sm:$0xff]
        %v2333 = vld [vmem:[%s251 + $0xe8] sm:$0xff]
        %v2334 = vld [vmem:[%s251 + $0xf0] sm:$0xff]
        %v2335 = vld [vmem:[%s251 + $0xf8] sm:$0xff]
        %v2336 = vld [vmem:[%s3] sm:$0xff]
        %v2337 = vld [vmem:[%s3 + $0x8] sm:$0xff]
        %v2338 = vld [vmem:[%s3 + $0x10] sm:$0xff]
        %v2339 = vld [vmem:[%s3 + $0x18] sm:$0xff]
        %vm2340 = vcmask 261120
        %v2342 = vsel %vm2340, %v2304, 0
        %v2345 = vsel %vm2340, %v2305, 0
        %v2348 = vsel %vm2340, %v2306, 0
        %v2351 = vsel %vm2340, %v2307, 0
        %v2354 = vsel %vm2340, %v2308, 0
        %v2357 = vsel %vm2340, %v2309, 0
        %v2360 = vsel %vm2340, %v2310, 0
        %v2363 = vsel %vm2340, %v2311, 0
        %v2366 = vsel %vm2340, %v2312, 0
        %v2369 = vsel %vm2340, %v2313, 0
        %v2372 = vsel %vm2340, %v2314, 0
        %v2375 = vsel %vm2340, %v2315, 0
        %v2378 = vsel %vm2340, %v2316, 0
        %v2381 = vsel %vm2340, %v2317, 0
        %v2384 = vsel %vm2340, %v2318, 0
        %v2387 = vsel %vm2340, %v2319, 0
        %v2390 = vsel %vm2340, %v2320, 0
        %v2393 = vsel %vm2340, %v2321, 0
        %v2396 = vsel %vm2340, %v2322, 0
        %v2399 = vsel %vm2340, %v2323, 0
        %v2402 = vsel %vm2340, %v2324, 0
        %v2405 = vsel %vm2340, %v2325, 0
        %v2408 = vsel %vm2340, %v2326, 0
        %v2411 = vsel %vm2340, %v2327, 0
        %v2414 = vsel %vm2340, %v2328, 0
        %v2417 = vsel %vm2340, %v2329, 0
        %v2420 = vsel %vm2340, %v2330, 0
        %v2423 = vsel %vm2340, %v2331, 0
        %v2426 = vsel %vm2340, %v2332, 0
        %v2429 = vsel %vm2340, %v2333, 0
        %v2432 = vsel %vm2340, %v2334, 0
        %v2435 = vsel %vm2340, %v2335, 0
        %2437 = vmatprep.subr.mxu0 0.0
        %2438 = vmatpush1.msra.mxu0 %v2336
        %2439 = vmatprep.subr.mxu0 0.0
        %2440 = vmatpush1.msra.mxu0 %v2337
        %2441 = vmatprep.subr.mxu0 0.0
        %2442 = vmatpush1.msra.mxu0 %v2338
        %2443 = vmatprep.subr.mxu0 0.0
        %2444 = vmatpush1.msra.mxu0 %v2339
        %2445 = vmatprep.subr.mxu0 0.0
        %2446 = vmatpush1.msra.mxu0 0.0
        %2447 = vmatprep.subr.mxu0 0.0
        %2448 = vmatpush1.msra.mxu0 0.0
        %2449 = vmatprep.subr.mxu0 0.0
        %2450 = vmatpush1.msra.mxu0 0.0
        %2451 = vmatprep.subr.mxu0 0.0
        %2452 = vmatpush1.msra.mxu0 0.0
        %2453 = vmatprep.subr.mxu0 0.0
        %2454 = vmatpush1.msra.mxu0 0.0
        %2455 = vmatprep.subr.mxu0 0.0
        %2456 = vmatpush1.msra.mxu0 0.0
        %2457 = vmatprep.subr.mxu0 0.0
        %2458 = vmatpush1.msra.mxu0 0.0
        %2459 = vmatprep.subr.mxu0 0.0
        %2460 = vmatpush1.msra.mxu0 0.0
        %2461 = vmatprep.subr.mxu0 0.0
        %2462 = vmatpush1.msra.mxu0 0.0
        %2463 = vmatprep.subr.mxu0 0.0
        %2464 = vmatpush1.msra.mxu0 0.0
        %2465 = vmatprep.subr.mxu0 0.0
        %2466 = vmatpush1.msra.mxu0 0.0
        %2467 = vmatprep.subr.mxu0 0.0
        %2468 = vmatpush1.msra.mxu0 0.0
        %2469 = vmatprep.subr.mxu0 0.0
        %2470 = vmatpush1.msra.mxu0 0.0
        %2471 = vmatprep.subr.mxu0 0.0
        %2472 = vmatpush1.msra.mxu0 0.0
        %2473 = vmatprep.subr.mxu0 0.0
        %2474 = vmatpush1.msra.mxu0 0.0
        %2475 = vmatprep.subr.mxu0 0.0
        %2476 = vmatpush1.msra.mxu0 0.0
        %2477 = vmatprep.subr.mxu0 0.0
        %2478 = vmatpush1.msra.mxu0 0.0
        %2479 = vmatprep.subr.mxu0 0.0
        %2480 = vmatpush1.msra.mxu0 0.0
        %2481 = vmatprep.subr.mxu0 0.0
        %2482 = vmatpush1.msra.mxu0 0.0
        %2483 = vmatprep.subr.mxu0 0.0
        %2484 = vmatpush1.msra.mxu0 0.0
        %2485 = vmatprep.subr.mxu0 0.0
        %2486 = vmatpush1.msra.mxu0 0.0
        %2487 = vmatprep.subr.mxu0 0.0
        %2488 = vmatpush1.msra.mxu0 0.0
        %2489 = vmatprep.subr.mxu0 0.0
        %2490 = vmatpush1.msra.mxu0 0.0
        %2491 = vmatprep.subr.mxu0 0.0
        %2492 = vmatpush1.msra.mxu0 0.0
        %2493 = vmatprep.subr.mxu0 0.0
        %2494 = vmatpush1.msra.mxu0 0.0
        %2495 = vmatprep.subr.mxu0 0.0
        %2496 = vmatpush1.msra.mxu0 0.0
        %2497 = vmatprep.subr.mxu0 0.0
        %2498 = vmatpush1.msra.mxu0 0.0
        %2499 = vmatprep.subr.mxu0 0.0
        %2500 = vmatpush1.msra.mxu0 0.0
        %2501 = vmatprep.mubr.f32.mxu0 0.0
        %2502 = vmatmul.mubr.f32.gmra.mrb[0].mxu0 %v2342
        %v2503 = vpop.f32.mrb[0].mxu0
        %v2504 = vadd.f32 %v2115, %v2503
        %v2505 = vpop.f32.mrb[0].mxu0
        %2506 = vmatprep.mubr.f32.mxu0 0.0
        %2507 = vmatmul.mubr.f32.gmra.mrb[0].mxu0 %v2345
        %v2508 = vpop.f32.mrb[0].mxu0
        %v2509 = vadd.f32 %v2121, %v2508
        %v2510 = vpop.f32.mrb[0].mxu0
        %2511 = vmatprep.mubr.f32.mxu0 0.0
        %2512 = vmatmul.mubr.f32.gmra.mrb[0].mxu0 %v2348
        %v2513 = vpop.f32.mrb[0].mxu0
        %v2514 = vadd.f32 %v2127, %v2513
        %v2515 = vpop.f32.mrb[0].mxu0
        %2516 = vmatprep.mubr.f32.mxu0 0.0
        %2517 = vmatmul.mubr.f32.gmra.mrb[0].mxu0 %v2351
        %v2518 = vpop.f32.mrb[0].mxu0
        %v2519 = vadd.f32 %v2133, %v2518
        %v2520 = vpop.f32.mrb[0].mxu0
        %2521 = vmatprep.mubr.f32.mxu0 0.0
        %2522 = vmatmul.mubr.f32.gmra.mrb[0].mxu0 %v2354
        %v2523 = vpop.f32.mrb[0].mxu0
        %v2524 = vadd.f32 %v2139, %v2523
        %v2525 = vpop.f32.mrb[0].mxu0
        %2526 = vmatprep.mubr.f32.mxu0 0.0
        %2527 = vmatmul.mubr.f32.gmra.mrb[0].mxu0 %v2357
        %v2528 = vpop.f32.mrb[0].mxu0
        %v2529 = vadd.f32 %v2145, %v2528
        %v2530 = vpop.f32.mrb[0].mxu0
        %2531 = vmatprep.mubr.f32.mxu0 0.0
        %2532 = vmatmul.mubr.f32.gmra.mrb[0].mxu0 %v2360
        %v2533 = vpop.f32.mrb[0].mxu0
        %v2534 = vadd.f32 %v2151, %v2533
        %v2535 = vpop.f32.mrb[0].mxu0
        %2536 = vmatprep.mubr.f32.mxu0 0.0
        %2537 = vmatmul.mubr.f32.gmra.mrb[0].mxu0 %v2363
        %v2538 = vpop.f32.mrb[0].mxu0
        %v2539 = vadd.f32 %v2157, %v2538
        %v2540 = vpop.f32.mrb[0].mxu0
        %2541 = vmatprep.mubr.f32.mxu0 0.0
        %2542 = vmatmul.mubr.f32.gmra.mrb[0].mxu0 %v2366
        %v2543 = vpop.f32.mrb[0].mxu0
        %v2544 = vadd.f32 %v2163, %v2543
        %v2545 = vpop.f32.mrb[0].mxu0
        %2546 = vmatprep.mubr.f32.mxu0 0.0
        %2547 = vmatmul.mubr.f32.gmra.mrb[0].mxu0 %v2369
        %v2548 = vpop.f32.mrb[0].mxu0
        %v2549 = vadd.f32 %v2169, %v2548
        %v2550 = vpop.f32.mrb[0].mxu0
        %2551 = vmatprep.mubr.f32.mxu0 0.0
        %2552 = vmatmul.mubr.f32.gmra.mrb[0].mxu0 %v2372
        %v2553 = vpop.f32.mrb[0].mxu0
        %v2554 = vadd.f32 %v2175, %v2553
        %v2555 = vpop.f32.mrb[0].mxu0
        %2556 = vmatprep.mubr.f32.mxu0 0.0
        %2557 = vmatmul.mubr.f32.gmra.mrb[0].mxu0 %v2375
        %v2558 = vpop.f32.mrb[0].mxu0
        %v2559 = vadd.f32 %v2181, %v2558
        %v2560 = vpop.f32.mrb[0].mxu0
        %2561 = vmatprep.mubr.f32.mxu0 0.0
        %2562 = vmatmul.mubr.f32.gmra.mrb[0].mxu0 %v2378
        %v2563 = vpop.f32.mrb[0].mxu0
        %v2564 = vadd.f32 %v2187, %v2563
        %v2565 = vpop.f32.mrb[0].mxu0
        %2566 = vmatprep.mubr.f32.mxu0 0.0
        %2567 = vmatmul.mubr.f32.gmra.mrb[0].mxu0 %v2381
        %v2568 = vpop.f32.mrb[0].mxu0
        %v2569 = vadd.f32 %v2193, %v2568
        %v2570 = vpop.f32.mrb[0].mxu0
        %2571 = vmatprep.mubr.f32.mxu0 0.0
        %2572 = vmatmul.mubr.f32.gmra.mrb[0].mxu0 %v2384
        %v2573 = vpop.f32.mrb[0].mxu0
        %v2574 = vadd.f32 %v2199, %v2573
        %v2575 = vpop.f32.mrb[0].mxu0
        %2576 = vmatprep.mubr.f32.mxu0 0.0
        %2577 = vmatmul.mubr.f32.gmra.mrb[0].mxu0 %v2387
        %v2578 = vpop.f32.mrb[0].mxu0
        %v2579 = vadd.f32 %v2205, %v2578
        %v2580 = vpop.f32.mrb[0].mxu0
        %2581 = vmatprep.mubr.f32.mxu0 0.0
        %2582 = vmatmul.mubr.f32.gmra.mrb[0].mxu0 %v2390
        %v2583 = vpop.f32.mrb[0].mxu0
        %v2584 = vadd.f32 %v2211, %v2583
        %v2585 = vpop.f32.mrb[0].mxu0
        %2586 = vmatprep.mubr.f32.mxu0 0.0
        %2587 = vmatmul.mubr.f32.gmra.mrb[0].mxu0 %v2393
        %v2588 = vpop.f32.mrb[0].mxu0
        %v2589 = vadd.f32 %v2217, %v2588
        %v2590 = vpop.f32.mrb[0].mxu0
        %2591 = vmatprep.mubr.f32.mxu0 0.0
        %2592 = vmatmul.mubr.f32.gmra.mrb[0].mxu0 %v2396
        %v2593 = vpop.f32.mrb[0].mxu0
        %v2594 = vadd.f32 %v2223, %v2593
        %v2595 = vpop.f32.mrb[0].mxu0
        %2596 = vmatprep.mubr.f32.mxu0 0.0
        %2597 = vmatmul.mubr.f32.gmra.mrb[0].mxu0 %v2399
        %v2598 = vpop.f32.mrb[0].mxu0
        %v2599 = vadd.f32 %v2229, %v2598
        %v2600 = vpop.f32.mrb[0].mxu0
        %2601 = vmatprep.mubr.f32.mxu0 0.0
        %2602 = vmatmul.mubr.f32.gmra.mrb[0].mxu0 %v2402
        %v2603 = vpop.f32.mrb[0].mxu0
        %v2604 = vadd.f32 %v2235, %v2603
        %v2605 = vpop.f32.mrb[0].mxu0
        %2606 = vmatprep.mubr.f32.mxu0 0.0
        %2607 = vmatmul.mubr.f32.gmra.mrb[0].mxu0 %v2405
        %v2608 = vpop.f32.mrb[0].mxu0
        %v2609 = vadd.f32 %v2241, %v2608
        %v2610 = vpop.f32.mrb[0].mxu0
        %2611 = vmatprep.mubr.f32.mxu0 0.0
        %2612 = vmatmul.mubr.f32.gmra.mrb[0].mxu0 %v2408
        %v2613 = vpop.f32.mrb[0].mxu0
        %v2614 = vadd.f32 %v2247, %v2613
        %v2615 = vpop.f32.mrb[0].mxu0
        %2616 = vmatprep.mubr.f32.mxu0 0.0
        %2617 = vmatmul.mubr.f32.gmra.mrb[0].mxu0 %v2411
        %v2618 = vpop.f32.mrb[0].mxu0
        %v2619 = vadd.f32 %v2253, %v2618
        %v2620 = vpop.f32.mrb[0].mxu0
        %2621 = vmatprep.mubr.f32.mxu0 0.0
        %2622 = vmatmul.mubr.f32.gmra.mrb[0].mxu0 %v2414
        %v2623 = vpop.f32.mrb[0].mxu0
        %v2624 = vadd.f32 %v2259, %v2623
        %v2625 = vpop.f32.mrb[0].mxu0
        %2626 = vmatprep.mubr.f32.mxu0 0.0
        %2627 = vmatmul.mubr.f32.gmra.mrb[0].mxu0 %v2417
        %v2628 = vpop.f32.mrb[0].mxu0
        %v2629 = vadd.f32 %v2265, %v2628
        %v2630 = vpop.f32.mrb[0].mxu0
        %2631 = vmatprep.mubr.f32.mxu0 0.0
        %2632 = vmatmul.mubr.f32.gmra.mrb[0].mxu0 %v2420
        %v2633 = vpop.f32.mrb[0].mxu0
        %v2634 = vadd.f32 %v2271, %v2633
        %v2635 = vpop.f32.mrb[0].mxu0
        %2636 = vmatprep.mubr.f32.mxu0 0.0
        %2637 = vmatmul.mubr.f32.gmra.mrb[0].mxu0 %v2423
        %v2638 = vpop.f32.mrb[0].mxu0
        %v2639 = vadd.f32 %v2277, %v2638
        %v2640 = vpop.f32.mrb[0].mxu0
        %2641 = vmatprep.mubr.f32.mxu0 0.0
        %2642 = vmatmul.mubr.f32.gmra.mrb[0].mxu0 %v2426
        %v2643 = vpop.f32.mrb[0].mxu0
        %v2644 = vadd.f32 %v2283, %v2643
        %v2645 = vpop.f32.mrb[0].mxu0
        %2646 = vmatprep.mubr.f32.mxu0 0.0
        %2647 = vmatmul.mubr.f32.gmra.mrb[0].mxu0 %v2429
        %v2648 = vpop.f32.mrb[0].mxu0
        %v2649 = vadd.f32 %v2289, %v2648
        %v2650 = vpop.f32.mrb[0].mxu0
        %2651 = vmatprep.mubr.f32.mxu0 0.0
        %2652 = vmatmul.mubr.f32.gmra.mrb[0].mxu0 %v2432
        %v2653 = vpop.f32.mrb[0].mxu0
        %v2654 = vadd.f32 %v2295, %v2653
        %v2655 = vpop.f32.mrb[0].mxu0
        %2656 = vmatprep.mubr.f32.mxu0 0.0
        %2657 = vmatmul.mubr.f32.gmra.mrb[0].mxu0 %v2435
        %v2658 = vpop.f32.mrb[0].mxu0
        %v2659 = vadd.f32 %v2301, %v2658
        %v2660 = vpop.f32.mrb[0].mxu0
        %2661 = vdwg.mxu0
        %2662 = vst [vmem:[%s229] sm:$0xff] %v2504
        %2663 = vst [vmem:[%s229 + $0x8] sm:$0xff] %v2509
        %2664 = vst [vmem:[%s229 + $0x10] sm:$0xff] %v2514
        %2665 = vst [vmem:[%s229 + $0x18] sm:$0xff] %v2519
        %2666 = vst [vmem:[%s229 + $0x20] sm:$0xff] %v2524
        %2667 = vst [vmem:[%s229 + $0x28] sm:$0xff] %v2529
        %2668 = vst [vmem:[%s229 + $0x30] sm:$0xff] %v2534
        %2669 = vst [vmem:[%s229 + $0x38] sm:$0xff] %v2539
        %2670 = vst [vmem:[%s229 + $0x40] sm:$0xff] %v2544
        %2671 = vst [vmem:[%s229 + $0x48] sm:$0xff] %v2549
        %2672 = vst [vmem:[%s229 + $0x50] sm:$0xff] %v2554
        %2673 = vst [vmem:[%s229 + $0x58] sm:$0xff] %v2559
        %2674 = vst [vmem:[%s229 + $0x60] sm:$0xff] %v2564
        %2675 = vst [vmem:[%s229 + $0x68] sm:$0xff] %v2569
        %2676 = vst [vmem:[%s229 + $0x70] sm:$0xff] %v2574
        %2677 = vst [vmem:[%s229 + $0x78] sm:$0xff] %v2579
        %2678 = vst [vmem:[%s229 + $0x80] sm:$0xff] %v2584
        %2679 = vst [vmem:[%s229 + $0x88] sm:$0xff] %v2589
        %2680 = vst [vmem:[%s229 + $0x90] sm:$0xff] %v2594
        %2681 = vst [vmem:[%s229 + $0x98] sm:$0xff] %v2599
        %2682 = vst [vmem:[%s229 + $0xa0] sm:$0xff] %v2604
        %2683 = vst [vmem:[%s229 + $0xa8] sm:$0xff] %v2609
        %2684 = vst [vmem:[%s229 + $0xb0] sm:$0xff] %v2614
        %2685 = vst [vmem:[%s229 + $0xb8] sm:$0xff] %v2619
        %2686 = vst [vmem:[%s229 + $0xc0] sm:$0xff] %v2624
        %2687 = vst [vmem:[%s229 + $0xc8] sm:$0xff] %v2629
        %2688 = vst [vmem:[%s229 + $0xd0] sm:$0xff] %v2634
        %2689 = vst [vmem:[%s229 + $0xd8] sm:$0xff] %v2639
        %2690 = vst [vmem:[%s229 + $0xe0] sm:$0xff] %v2644
        %2691 = vst [vmem:[%s229 + $0xe8] sm:$0xff] %v2649
        %2692 = vst [vmem:[%s229 + $0xf0] sm:$0xff] %v2654
        %2693 = vst [vmem:[%s229 + $0xf8] sm:$0xff] %v2659
        %s2694 = sand.u32 %s120, 1
        %s2695 = scalar_lea.sflag [#allocation3], %s2694
        %s2696 = sand.u32 %s120, 1
        %s2697 = smul.addr %s2696, 256
        %s2698 = scalar_lea.vmem [#allocation2], %s2697
        // Predicated region
        $region37: #{serialized_unpooling_forward.3} parent=35 // pred_check
          %p2699 = pneg %p130
        $region38: #{serialized_unpooling_forward.3} parent=35 // pred_check_branch
          %2701 = sbr.rel (%p2699) target = $region40
        $region39: #{serialized_unpooling_forward.3} parent=35 // pred_region
          %s2702 = smul.u32 32, %s18
          %s2703 = ssub.s32 38, %s2702
          %p2704 = scmp.lt.s32.totalorder %s2703, 32
          %s2705 = scalar_select %p2704, %s2703, 32
          %s2706 = smul.u32 128, %s2705
          %s2708 = ssub.s32 4096, %s2706
          %2709 = vsyncadd %s2695, %s2708
          %p2710 = scmp.ne.s32.totalorder 0, %s2706
          %s2711 = smul.addr %s2702, 128
          %s2712 = scalar_lea.hbm %s4, %s2711
          %s2713 = smul.u32 8, %s2705
          %s2714 = sshll.u32 %s2698, 4
          %s2715 = int_to_ptr.vmem [resolvable:$true] %s2714
          %s2716 = sshll.u32 %s2713, 4
          %2720 = dma.vmem_to_hbm [thread:$0]  (%p2710), %s2715, %s2716, %s2712, %s2695, 128, 128, 8
        $region40: #{serialized_unpooling_forward.3} parent=35 // pred_fallthru
          _
      $region36: #{serialized_unpooling_forward.3} parent=5 // pred_fallthru
        _
      %p2721 = scmp.le.s32.totalorder 2, %s13
      // Predicated region
      $region41: #{serialized_unpooling_forward.3} parent=5 // pred_check
        %p2722 = pneg %p2721
      $region42: #{serialized_unpooling_forward.3} parent=5 // pred_check_branch
        %2724 = sbr.rel (%p2722) target = $region44
      $region43: #{serialized_unpooling_forward.3} parent=5 // pred_region
        %s2725 = ssub.s32 %s13, 2
        // Predicated region
        $region45: #{serialized_unpooling_forward.3} parent=43 // pred_check
          %p2726 = pneg %p136
        $region46: #{serialized_unpooling_forward.3} parent=43 // pred_check_branch
          %2728 = sbr.rel (%p2726) target = $region48
        $region47: #{serialized_unpooling_forward.3} parent=43 // pred_region
          %s2729 = sand.u32 %s121, 1
          %s2730 = scalar_lea.sflag [#allocation3], %s2729
          %s2731 = sand.u32 %s121, 1
          %s2732 = smul.addr %s2731, 256
          %s2733 = scalar_lea.vmem [#allocation2], %s2732
          %2734 = dma.done %s2730, 4096
        $region48: #{serialized_unpooling_forward.3} parent=43 // pred_fallthru
          _
      $region44: #{serialized_unpooling_forward.3} parent=5 // pred_fallthru
        _
    $region6: #{serialized_unpooling_forward.3} parent=1 // loop_footer
      %s17 = sadd.s32 1, %s13
    $region7: #{serialized_unpooling_forward.3} parent=1 // loop_footer_branch
      %12 = sbr.rel target = $region3
    $region8: #{serialized_unpooling_forward.3} parent=1 // loop_exit
      _
    %2735 = vsyncpa [#allocation3], 1
    %s2736 = scalar_lea.sflag [#allocation3], 1
    %2737 = vsyncpa %s2736, 1

</llo_original>
